<compile_context>
chip_gen: v7x
topology: tpu7x:2x2x1
jax: 0.10.0
libtpu: 0.0.40
codegen_flags: <defaults>
</compile_context>

<pallas_src>
import math
import functools

import jax
import jax.numpy as jnp
from jax import lax
from jax.experimental import pallas as pl
from jax.experimental.pallas import tpu as pltpu


def _layernorm(x, gamma, beta, eps=1e-12):
    # matches torch: mean / biased var over last dim; rsqrt goes to the EUP slot
    mean = jnp.mean(x, axis=-1, keepdims=True)
    var = jnp.mean(jnp.square(x - mean), axis=-1, keepdims=True)
    return gamma * ((x - mean) * lax.rsqrt(var + eps)) + beta


def _encoder_layer_kernel(n_head,
                          x_ref,
                          wqkv_ref, bqkv_ref,
                          wo_ref, bo_ref,
                          g1_ref, be1_ref,
                          w1_ref, b1_ref, w2_ref, b2_ref,
                          g2_ref, be2_ref,
                          o_ref):
    """One grid step processes one batch element; x_ref is (S, D) (batch dim squeezed)."""
    S, D = x_ref.shape
    H = n_head
    dt = D // H

    # Load the activation tile once; derive both precisions from that single read.
    x = x_ref[...]                               # (S, D) f32 -- residual / LayerNorm path
    xb = x.astype(jnp.bfloat16)                  # MXU feed

    # --- fused Q/K/V projection: one (S,D) @ (D,3D) matmul, bf16 in / f32 acc ---
    # 1/sqrt(dt) softmax scale is already folded into the wq/bq columns host-side.
    qkv = jnp.dot(xb, wqkv_ref[...], preferred_element_type=jnp.float32) + bqkv_ref[...]
    qkv_b = qkv.astype(jnp.bfloat16)             # single whole-slab (S, 3D) cast

    # Head-batched layout (H, S, dt): ONE relayout per q/k/v slab instead of H per-head
    # lane-dim slices + H implicit K transposes inside the head loop.
    def heads(t2d):
        return t2d.reshape(S, H, dt).transpose(1, 0, 2)

    qh = heads(qkv_b[:, 0 * D:1 * D])            # slabs sliced at D (lane-tile) boundaries
    kh = heads(qkv_b[:, 1 * D:2 * D])
    vh = heads(qkv_b[:, 2 * D:3 * D])

    # --- scaled dot-product attention, all heads batched ---
    # scores[h, i, j] = sum_d qh[h, i, d] * kh[h, j, d]   (batch dim = heads)
    s = lax.dot_general(qh, kh, (((2,), (2,)), ((0,), (0,))),
                        preferred_element_type=jnp.float32)               # (H, S, S) f32
    s = s - jnp.max(s, axis=-1, keepdims=True)                            # stable softmax
    p = jnp.exp(s)
    p = p * pl.reciprocal(jnp.sum(p, axis=-1, keepdims=True), approx=True)

    # context: (H,S,S) @ (H,S,dt) -> (H,S,dt), batched over heads
    ctx = lax.dot_general(p.astype(jnp.bfloat16), vh,
                          (((2,), (1,)), ((0,), (0,))),
                          preferred_element_type=jnp.float32)

    # Concat heads back to a lane-dense (S, D) slab, then ONE full-K output projection.
    ctx_sd = ctx.transpose(1, 0, 2).reshape(S, D).astype(jnp.bfloat16)
    attn = jnp.dot(ctx_sd, wo_ref[...], preferred_element_type=jnp.float32) + bo_ref[...]

    # TODO(synk): dropout1/dropout2 and FFN dropout are identity (inference mode), no RNG;
    #             src_mask path not implemented (module default mask=None).
    h1 = _layernorm(attn + x, g1_ref[...], be1_ref[...])

    # --- positionwise feed-forward ---
    ff = jnp.dot(h1.astype(jnp.bfloat16), w1_ref[...],
                 preferred_element_type=jnp.float32) + b1_ref[...]
    ff = jnp.maximum(ff, 0.0)
    ff = jnp.dot(ff.astype(jnp.bfloat16), w2_ref[...],
                 preferred_element_type=jnp.float32) + b2_ref[...]

    out = _layernorm(ff + h1, g2_ref[...], be2_ref[...])
    o_ref[...] = out.astype(o_ref.dtype)


def encoder_layer(x, params, n_head):
    """x: (B, S, D) float32. Grid over batch; each step keeps the whole (S, D) slab in VMEM."""
    B, S, D = x.shape
    assert D % n_head == 0
    dt = D // n_head
    FFN = params["w1"].shape[1]
    scale = 1.0 / math.sqrt(dt)

    bf16 = lambda w: w.astype(jnp.bfloat16)
    # Fuse q/k/v projection weights host-side; fold the softmax scale into the Q columns/bias.
    wqkv = bf16(jnp.concatenate(
        [params["wq"] * scale, params["wk"], params["wv"]], axis=1))          # (D, 3D) bf16
    bqkv = jnp.concatenate(
        [params["bq"] * scale, params["bk"], params["bv"]], axis=1)           # (1, 3D) f32

    weights = [
        wqkv, bqkv,
        bf16(params["wo"]), params["bo"],
        params["g1"], params["be1"],
        bf16(params["w1"]), params["b1"],
        bf16(params["w2"]), params["b2"],
        params["g2"], params["be2"],
    ]

    # Grid-invariant weights: constant index_map + single-buffered (double-buffering a
    # constant block only wastes VMEM, which matters on v7x's 64 MiB/TC).
    def weight_spec(w):
        return pl.BlockSpec(w.shape, lambda b: (0, 0), pipeline_mode=pl.Buffered(1))

    act_spec = pl.BlockSpec((pl.Squeezed(), S, D), lambda b: (b, 0, 0))
    in_specs = [act_spec] + [weight_spec(w) for w in weights]

    # --- VMEM budget derived from shapes (instead of a hardcoded constant) ---
    H = n_head
    wbytes = sum(int(w.size) * w.dtype.itemsize for w in weights)        # single-buffered
    abytes = 2 * 2 * S * D * 4                                           # x in + out, double-buffered
    ibytes = (S * 3 * D * (4 + 2)                                        # qkv f32 + bf16 slab
              + 3 * H * S * dt * 2                                       # (H,S,dt) q/k/v bf16
              + 3 * H * S * S * 4                                        # scores/probs (f32, margin)
              + H * S * dt * 4 + S * D * (4 + 2)                         # ctx + concat slab
              + S * FFN * (4 + 2)                                        # FFN hidden f32 + bf16
              + 4 * S * D * 4)                                           # attn / h1 / ff / out
    # 2x safety factor + 4 MiB; floor at the 32 MiB default, cap at 48 MiB to leave
    # headroom below v7x's 64 MiB/TC (v5e/v6e have 128 MiB so the cap is conservative there).
    vmem_limit = int(min(max(2 * (wbytes + abytes + ibytes) + (4 << 20), 32 << 20), 48 << 20))

    # Advisory cost estimate for XLA scheduling around the custom call.
    flops_per_batch = (2 * S * D * 3 * D          # fused qkv projection
                       + 4 * H * S * S * dt       # scores + ctx over all heads
                       + 2 * S * D * D            # output projection
                       + 4 * S * D * FFN)         # FFN (two matmuls)
    transcendentals = B * (H * S * S + H * S + 2 * S)      # exp + recip + rsqrt
    bytes_accessed = 2 * x.size * x.dtype.itemsize + wbytes
    cost = pl.CostEstimate(flops=int(B * flops_per_batch),
                           transcendentals=int(transcendentals),
                           bytes_accessed=int(bytes_accessed))

    return pl.pallas_call(
        functools.partial(_encoder_layer_kernel, n_head),
        out_shape=jax.ShapeDtypeStruct((B, S, D), x.dtype),
        grid=(B,),
        in_specs=in_specs,
        out_specs=act_spec,
        compiler_params=pltpu.CompilerParams(
            dimension_semantics=("parallel",),
            vmem_limit_bytes=vmem_limit),
        cost_estimate=cost,
    )(x, *weights)


# ---------------- pure-JAX reference (for correctness check) ----------------
def encoder_layer_ref(x, params, n_head, matmul_dtype=jnp.float32):
    """matmul_dtype=bf16 mirrors the kernel's mixed precision (bf16 MXU feeds, f32 accum)."""
    B, S, D = x.shape
    dt = D // n_head
    md = matmul_dtype

    def lin(h, w, b):
        return jnp.dot(h.astype(md), w.astype(md),
                       preferred_element_type=jnp.float32) + b

    q = lin(x, params["wq"], params["bq"])
    k = lin(x, params["wk"], params["bk"])
    v = lin(x, params["wv"], params["bv"])

    def split(t):  # (B,S,D) -> (B,H,S,dt)
        return t.reshape(B, S, n_head, dt).transpose(0, 2, 1, 3)

    qh, kh, vh = split(q), split(k), split(v)
    score = jnp.einsum("bhqd,bhkd->bhqk", qh.astype(md), kh.astype(md),
                       preferred_element_type=jnp.float32) / math.sqrt(dt)
    p = jax.nn.softmax(score, axis=-1)
    ctx = jnp.einsum("bhqk,bhkd->bhqd", p.astype(md), vh.astype(md),
                     preferred_element_type=jnp.float32)
    ctx = ctx.transpose(0, 2, 1, 3).reshape(B, S, D)
    attn = lin(ctx, params["wo"], params["bo"])

    def ln(h, g, b, eps=1e-12):
        m = h.mean(-1, keepdims=True)
        var = ((h - m) ** 2).mean(-1, keepdims=True)
        return g * ((h - m) / jnp.sqrt(var + eps)) + b

    h1 = ln(attn + x, params["g1"], params["be1"])
    ff = jnp.maximum(lin(h1, params["w1"], params["b1"]), 0.0)
    ff = lin(ff, params["w2"], params["b2"])
    return ln(ff + h1, params["g2"], params["be2"])


def make_params(key, d_model, ffn_hidden):
    ks = jax.random.split(key, 8)
    s_d = 1.0 / math.sqrt(d_model)
    s_h = 1.0 / math.sqrt(ffn_hidden)
    return {
        "wq": jax.random.uniform(ks[0], (d_model, d_model), jnp.float32, -s_d, s_d),
        "wk": jax.random.uniform(ks[1], (d_model, d_model), jnp.float32, -s_d, s_d),
        "wv": jax.random.uniform(ks[2], (d_model, d_model), jnp.float32, -s_d, s_d),
        "wo": jax.random.uniform(ks[3], (d_model, d_model), jnp.float32, -s_d, s_d),
        "bq": jax.random.uniform(ks[4], (1, d_model), jnp.float32, -s_d, s_d),
        "bk": jax.random.uniform(ks[5], (1, d_model), jnp.float32, -s_d, s_d),
        "bv": jax.random.uniform(ks[6], (1, d_model), jnp.float32, -s_d, s_d),
        "bo": jnp.zeros((1, d_model), jnp.float32),
        "w1": jax.random.uniform(ks[7], (d_model, ffn_hidden), jnp.float32, -s_d, s_d),
        "b1": jnp.zeros((1, ffn_hidden), jnp.float32),
        "w2": jax.random.uniform(ks[0], (ffn_hidden, d_model), jnp.float32, -s_h, s_h),
        "b2": jnp.zeros((1, d_model), jnp.float32),
        # LayerNorm init: gamma=1, beta=0 (as in the PyTorch module)
        "g1": jnp.ones((1, d_model), jnp.float32),
        "be1": jnp.zeros((1, d_model), jnp.float32),
        "g2": jnp.ones((1, d_model), jnp.float32),
        "be2": jnp.zeros((1, d_model), jnp.float32),
    }


if __name__ == "__main__":
    # Small but lane-dense shapes (D multiple of 128, dt multiple of the bf16 sublane pack)
    # so the output BlockSpec lowers to unmasked vector stores.
    B, S, D, H, FFN = 2, 16, 128, 4, 256
    key = jax.random.PRNGKey(0)
    kx, kp = jax.random.split(key)
    x = jax.random.normal(kx, (B, S, D), jnp.float32)
    params = make_params(kp, D, FFN)

    out = jax.block_until_ready(encoder_layer(x, params, n_head=H))
    assert out.shape == (B, S, D)

    # Check against a reference that mirrors the kernel's bf16-feed / f32-accumulate matmuls
    # (small residual diff from the host-side scale fold + approx reciprocal).
    ref_mixed = encoder_layer_ref(x, params, n_head=H, matmul_dtype=jnp.bfloat16)
    err_mixed = float(jnp.max(jnp.abs(out - ref_mixed)))
    assert jnp.allclose(out, ref_mixed, atol=2e-2, rtol=2e-2), err_mixed

    # Looser sanity check against the exact f32 (torch-semantics) reference:
    # the only differences are the deliberate bf16 MXU feeds + approx reciprocal.
    ref_f32 = encoder_layer_ref(x, params, n_head=H, matmul_dtype=jnp.float32)
    err_f32 = float(jnp.max(jnp.abs(out - ref_f32)))
    assert jnp.allclose(out, ref_f32, atol=1e-1, rtol=1e-1), err_f32

    print("KERNEL_OK")
</pallas_src>

<mosaic_0001>
module attributes {stable_mosaic.version = 11 : i64} {
  func.func @_encoder_layer_kernel(%arg0: i32, %arg1: memref<1x16x128xf32, #tpu.memory_space<vmem>>, %arg2: memref<128x384xbf16, #tpu.memory_space<vmem>>, %arg3: memref<1x384xf32, #tpu.memory_space<vmem>>, %arg4: memref<128x128xbf16, #tpu.memory_space<vmem>>, %arg5: memref<1x128xf32, #tpu.memory_space<vmem>>, %arg6: memref<1x128xf32, #tpu.memory_space<vmem>>, %arg7: memref<1x128xf32, #tpu.memory_space<vmem>>, %arg8: memref<128x256xbf16, #tpu.memory_space<vmem>>, %arg9: memref<1x256xf32, #tpu.memory_space<vmem>>, %arg10: memref<256x128xbf16, #tpu.memory_space<vmem>>, %arg11: memref<1x128xf32, #tpu.memory_space<vmem>>, %arg12: memref<1x128xf32, #tpu.memory_space<vmem>>, %arg13: memref<1x128xf32, #tpu.memory_space<vmem>>, %arg14: memref<1x16x128xf32, #tpu.memory_space<vmem>>) attributes {dimension_semantics = [#tpu.dimension_semantics<parallel>], iteration_bounds = array<i64: 2>, scalar_prefetch = 0 : i64, scratch_operands = 0 : i64, tpu.core_type = #tpu.core_type<tc>, window_params = [{transform_indices = @transform_0, window_bounds = array<i64: 1, 16, 128>}, {pipeline_mode = #tpu.pipeline_mode<synchronous>, transform_indices = @transform_1, window_bounds = array<i64: 128, 384>}, {pipeline_mode = #tpu.pipeline_mode<synchronous>, transform_indices = @transform_2, window_bounds = array<i64: 1, 384>}, {pipeline_mode = #tpu.pipeline_mode<synchronous>, transform_indices = @transform_3, window_bounds = array<i64: 128, 128>}, {pipeline_mode = #tpu.pipeline_mode<synchronous>, transform_indices = @transform_4, window_bounds = array<i64: 1, 128>}, {pipeline_mode = #tpu.pipeline_mode<synchronous>, transform_indices = @transform_5, window_bounds = array<i64: 1, 128>}, {pipeline_mode = #tpu.pipeline_mode<synchronous>, transform_indices = @transform_6, window_bounds = array<i64: 1, 128>}, {pipeline_mode = #tpu.pipeline_mode<synchronous>, transform_indices = @transform_7, window_bounds = array<i64: 128, 256>}, {pipeline_mode = #tpu.pipeline_mode<synchronous>, transform_indices = @transform_8, window_bounds = array<i64: 1, 256>}, {pipeline_mode = #tpu.pipeline_mode<synchronous>, transform_indices = @transform_9, window_bounds = array<i64: 256, 128>}, {pipeline_mode = #tpu.pipeline_mode<synchronous>, transform_indices = @transform_10, window_bounds = array<i64: 1, 128>}, {pipeline_mode = #tpu.pipeline_mode<synchronous>, transform_indices = @transform_11, window_bounds = array<i64: 1, 128>}, {pipeline_mode = #tpu.pipeline_mode<synchronous>, transform_indices = @transform_12, window_bounds = array<i64: 1, 128>}, {transform_indices = @transform_13, window_bounds = array<i64: 1, 16, 128>}]} {
    %c0 = arith.constant 0 : index
    %c0_0 = arith.constant 0 : index
    %c0_1 = arith.constant 0 : index
    %0 = vector.load %arg1[%c0, %c0_0, %c0_1] : memref<1x16x128xf32, #tpu.memory_space<vmem>>, vector<1x16x128xf32>
    %1 = vector.shape_cast %0 : vector<1x16x128xf32> to vector<16x128xf32>
    %2 = arith.truncf %1 : vector<16x128xf32> to vector<16x128xbf16>
    %c0_2 = arith.constant 0 : index
    %c0_3 = arith.constant 0 : index
    %3 = vector.load %arg2[%c0_2, %c0_3] : memref<128x384xbf16, #tpu.memory_space<vmem>>, vector<128x384xbf16>
    %cst = arith.constant dense<0.000000e+00> : vector<16x384xf32>
    %4 = tpu.matmul %2, %3, %cst {dimension_numbers = #tpu.dot_dimension_numbers<[1], [0], [0], [1], [0, 0, 1, 1], [], []>} : vector<16x128xbf16>, vector<128x384xbf16>, vector<16x384xf32> -> vector<16x384xf32>
    %c0_4 = arith.constant 0 : index
    %c0_5 = arith.constant 0 : index
    %5 = vector.load %arg3[%c0_4, %c0_5] : memref<1x384xf32, #tpu.memory_space<vmem>>, vector<1x384xf32>
    %6 = vector.broadcast %5 : vector<1x384xf32> to vector<16x384xf32>
    %7 = arith.addf %4, %6 : vector<16x384xf32>
    %8 = arith.truncf %7 : vector<16x384xf32> to vector<16x384xbf16>
    %9 = vector.extract_strided_slice %8 {offsets = [0, 0], sizes = [16, 128], strides = [1, 1]} : vector<16x384xbf16> to vector<16x128xbf16>
    %10 = vector.shape_cast %9 : vector<16x128xbf16> to vector<16x4x32xbf16>
    %11 = tpu.transpose %10, [1, 0, 2] : vector<16x4x32xbf16> -> vector<4x16x32xbf16>
    %12 = vector.extract_strided_slice %8 {offsets = [0, 128], sizes = [16, 128], strides = [1, 1]} : vector<16x384xbf16> to vector<16x128xbf16>
    %13 = vector.shape_cast %12 : vector<16x128xbf16> to vector<16x4x32xbf16>
    %14 = tpu.transpose %13, [1, 0, 2] : vector<16x4x32xbf16> -> vector<4x16x32xbf16>
    %15 = vector.extract_strided_slice %8 {offsets = [0, 256], sizes = [16, 128], strides = [1, 1]} : vector<16x384xbf16> to vector<16x128xbf16>
    %16 = vector.shape_cast %15 : vector<16x128xbf16> to vector<16x4x32xbf16>
    %17 = tpu.transpose %16, [1, 0, 2] : vector<16x4x32xbf16> -> vector<4x16x32xbf16>
    %cst_6 = arith.constant dense<0.000000e+00> : vector<4x16x16xf32>
    %18 = tpu.matmul %11, %14, %cst_6 {dimension_numbers = #tpu.dot_dimension_numbers<[2], [2], [1], [1], [0, 0, 0, 1, 1, 1], [0], [0]>} : vector<4x16x32xbf16>, vector<4x16x32xbf16>, vector<4x16x16xf32> -> vector<4x16x16xf32>
    %cst_7 = arith.constant dense<0xFF800000> : vector<4x16xf32>
    %19 = vector.multi_reduction <maximumf>, %18, %cst_7 [2] : vector<4x16x16xf32> to vector<4x16xf32>
    %20 = vector.shape_cast %19 : vector<4x16xf32> to vector<4x16x1xf32>
    %21 = vector.broadcast %20 : vector<4x16x1xf32> to vector<4x16x16xf32>
    %22 = arith.subf %18, %21 : vector<4x16x16xf32>
    %23 = math.exp %22 : vector<4x16x16xf32>
    %cst_8 = arith.constant dense<0.000000e+00> : vector<4x16xf32>
    %24 = vector.multi_reduction <add>, %23, %cst_8 [2] : vector<4x16x16xf32> to vector<4x16xf32>
    %25 = vector.shape_cast %24 : vector<4x16xf32> to vector<4x16x1xf32>
    %26 = tpu.reciprocal %25 {approx = true} : vector<4x16x1xf32> -> vector<4x16x1xf32>
    %27 = vector.broadcast %26 : vector<4x16x1xf32> to vector<4x16x16xf32>
    %28 = arith.mulf %23, %27 : vector<4x16x16xf32>
    %29 = arith.truncf %28 : vector<4x16x16xf32> to vector<4x16x16xbf16>
    %cst_9 = arith.constant dense<0.000000e+00> : vector<4x16x32xf32>
    %30 = tpu.matmul %29, %17, %cst_9 {dimension_numbers = #tpu.dot_dimension_numbers<[2], [1], [1], [2], [0, 0, 0, 1, 1, 2], [0], [0]>} : vector<4x16x16xbf16>, vector<4x16x32xbf16>, vector<4x16x32xf32> -> vector<4x16x32xf32>
    %31 = tpu.transpose %30, [1, 0, 2] : vector<4x16x32xf32> -> vector<16x4x32xf32>
    %32 = vector.shape_cast %31 : vector<16x4x32xf32> to vector<16x128xf32>
    %33 = arith.truncf %32 : vector<16x128xf32> to vector<16x128xbf16>
    %c0_10 = arith.constant 0 : index
    %c0_11 = arith.constant 0 : index
    %34 = vector.load %arg4[%c0_10, %c0_11] : memref<128x128xbf16, #tpu.memory_space<vmem>>, vector<128x128xbf16>
    %cst_12 = arith.constant dense<0.000000e+00> : vector<16x128xf32>
    %35 = tpu.matmul %33, %34, %cst_12 {dimension_numbers = #tpu.dot_dimension_numbers<[1], [0], [0], [1], [0, 0, 1, 1], [], []>} : vector<16x128xbf16>, vector<128x128xbf16>, vector<16x128xf32> -> vector<16x128xf32>
    %c0_13 = arith.constant 0 : index
    %c0_14 = arith.constant 0 : index
    %36 = vector.load %arg5[%c0_13, %c0_14] : memref<1x128xf32, #tpu.memory_space<vmem>>, vector<1x128xf32>
    %37 = vector.broadcast %36 : vector<1x128xf32> to vector<16x128xf32>
    %38 = arith.addf %35, %37 : vector<16x128xf32>
    %39 = arith.addf %38, %1 : vector<16x128xf32>
    %c0_15 = arith.constant 0 : index
    %c0_16 = arith.constant 0 : index
    %40 = vector.load %arg6[%c0_15, %c0_16] : memref<1x128xf32, #tpu.memory_space<vmem>>, vector<1x128xf32>
    %c0_17 = arith.constant 0 : index
    %c0_18 = arith.constant 0 : index
    %41 = vector.load %arg7[%c0_17, %c0_18] : memref<1x128xf32, #tpu.memory_space<vmem>>, vector<1x128xf32>
    %cst_19 = arith.constant dense<0.000000e+00> : vector<16xf32>
    %42 = vector.multi_reduction <add>, %39, %cst_19 [1] : vector<16x128xf32> to vector<16xf32>
    %43 = vector.shape_cast %42 : vector<16xf32> to vector<16x1xf32>
    %cst_20 = arith.constant 1.280000e+02 : f32
    %44 = vector.broadcast %cst_20 : f32 to vector<16x1xf32>
    %45 = arith.divf %43, %44 : vector<16x1xf32>
    %46 = vector.broadcast %45 : vector<16x1xf32> to vector<16x128xf32>
    %47 = arith.subf %39, %46 : vector<16x128xf32>
    %48 = arith.mulf %47, %47 : vector<16x128xf32>
    %cst_21 = arith.constant dense<0.000000e+00> : vector<16xf32>
    %49 = vector.multi_reduction <add>, %48, %cst_21 [1] : vector<16x128xf32> to vector<16xf32>
    %50 = vector.shape_cast %49 : vector<16xf32> to vector<16x1xf32>
    %cst_22 = arith.constant 1.280000e+02 : f32
    %51 = vector.broadcast %cst_22 : f32 to vector<16x1xf32>
    %52 = arith.divf %50, %51 : vector<16x1xf32>
    %53 = vector.broadcast %45 : vector<16x1xf32> to vector<16x128xf32>
    %54 = arith.subf %39, %53 : vector<16x128xf32>
    %cst_23 = arith.constant 9.99999996E-13 : f32
    %55 = vector.broadcast %cst_23 : f32 to vector<16x1xf32>
    %56 = arith.addf %52, %55 : vector<16x1xf32>
    %57 = math.rsqrt %56 : vector<16x1xf32>
    %58 = vector.broadcast %57 : vector<16x1xf32> to vector<16x128xf32>
    %59 = arith.mulf %54, %58 : vector<16x128xf32>
    %60 = vector.broadcast %40 : vector<1x128xf32> to vector<16x128xf32>
    %61 = arith.mulf %60, %59 : vector<16x128xf32>
    %62 = vector.broadcast %41 : vector<1x128xf32> to vector<16x128xf32>
    %63 = arith.addf %61, %62 : vector<16x128xf32>
    %64 = arith.truncf %63 : vector<16x128xf32> to vector<16x128xbf16>
    %c0_24 = arith.constant 0 : index
    %c0_25 = arith.constant 0 : index
    %65 = vector.load %arg8[%c0_24, %c0_25] : memref<128x256xbf16, #tpu.memory_space<vmem>>, vector<128x256xbf16>
    %cst_26 = arith.constant dense<0.000000e+00> : vector<16x256xf32>
    %66 = tpu.matmul %64, %65, %cst_26 {dimension_numbers = #tpu.dot_dimension_numbers<[1], [0], [0], [1], [0, 0, 1, 1], [], []>} : vector<16x128xbf16>, vector<128x256xbf16>, vector<16x256xf32> -> vector<16x256xf32>
    %c0_27 = arith.constant 0 : index
    %c0_28 = arith.constant 0 : index
    %67 = vector.load %arg9[%c0_27, %c0_28] : memref<1x256xf32, #tpu.memory_space<vmem>>, vector<1x256xf32>
    %68 = vector.broadcast %67 : vector<1x256xf32> to vector<16x256xf32>
    %69 = arith.addf %66, %68 : vector<16x256xf32>
    %cst_29 = arith.constant 0.000000e+00 : f32
    %70 = vector.broadcast %cst_29 : f32 to vector<16x256xf32>
    %71 = arith.maximumf %69, %70 : vector<16x256xf32>
    %72 = arith.truncf %71 : vector<16x256xf32> to vector<16x256xbf16>
    %c0_30 = arith.constant 0 : index
    %c0_31 = arith.constant 0 : index
    %73 = vector.load %arg10[%c0_30, %c0_31] : memref<256x128xbf16, #tpu.memory_space<vmem>>, vector<256x128xbf16>
    %cst_32 = arith.constant dense<0.000000e+00> : vector<16x128xf32>
    %74 = tpu.matmul %72, %73, %cst_32 {dimension_numbers = #tpu.dot_dimension_numbers<[1], [0], [0], [1], [0, 0, 1, 1], [], []>} : vector<16x256xbf16>, vector<256x128xbf16>, vector<16x128xf32> -> vector<16x128xf32>
    %c0_33 = arith.constant 0 : index
    %c0_34 = arith.constant 0 : index
    %75 = vector.load %arg11[%c0_33, %c0_34] : memref<1x128xf32, #tpu.memory_space<vmem>>, vector<1x128xf32>
    %76 = vector.broadcast %75 : vector<1x128xf32> to vector<16x128xf32>
    %77 = arith.addf %74, %76 : vector<16x128xf32>
    %78 = arith.addf %77, %63 : vector<16x128xf32>
    %c0_35 = arith.constant 0 : index
    %c0_36 = arith.constant 0 : index
    %79 = vector.load %arg12[%c0_35, %c0_36] : memref<1x128xf32, #tpu.memory_space<vmem>>, vector<1x128xf32>
    %c0_37 = arith.constant 0 : index
    %c0_38 = arith.constant 0 : index
    %80 = vector.load %arg13[%c0_37, %c0_38] : memref<1x128xf32, #tpu.memory_space<vmem>>, vector<1x128xf32>
    %cst_39 = arith.constant dense<0.000000e+00> : vector<16xf32>
    %81 = vector.multi_reduction <add>, %78, %cst_39 [1] : vector<16x128xf32> to vector<16xf32>
    %82 = vector.shape_cast %81 : vector<16xf32> to vector<16x1xf32>
    %cst_40 = arith.constant 1.280000e+02 : f32
    %83 = vector.broadcast %cst_40 : f32 to vector<16x1xf32>
    %84 = arith.divf %82, %83 : vector<16x1xf32>
    %85 = vector.broadcast %84 : vector<16x1xf32> to vector<16x128xf32>
    %86 = arith.subf %78, %85 : vector<16x128xf32>
    %87 = arith.mulf %86, %86 : vector<16x128xf32>
    %cst_41 = arith.constant dense<0.000000e+00> : vector<16xf32>
    %88 = vector.multi_reduction <add>, %87, %cst_41 [1] : vector<16x128xf32> to vector<16xf32>
    %89 = vector.shape_cast %88 : vector<16xf32> to vector<16x1xf32>
    %cst_42 = arith.constant 1.280000e+02 : f32
    %90 = vector.broadcast %cst_42 : f32 to vector<16x1xf32>
    %91 = arith.divf %89, %90 : vector<16x1xf32>
    %92 = vector.broadcast %84 : vector<16x1xf32> to vector<16x128xf32>
    %93 = arith.subf %78, %92 : vector<16x128xf32>
    %cst_43 = arith.constant 9.99999996E-13 : f32
    %94 = vector.broadcast %cst_43 : f32 to vector<16x1xf32>
    %95 = arith.addf %91, %94 : vector<16x1xf32>
    %96 = math.rsqrt %95 : vector<16x1xf32>
    %97 = vector.broadcast %96 : vector<16x1xf32> to vector<16x128xf32>
    %98 = arith.mulf %93, %97 : vector<16x128xf32>
    %99 = vector.broadcast %79 : vector<1x128xf32> to vector<16x128xf32>
    %100 = arith.mulf %99, %98 : vector<16x128xf32>
    %101 = vector.broadcast %80 : vector<1x128xf32> to vector<16x128xf32>
    %102 = arith.addf %100, %101 : vector<16x128xf32>
    %c0_44 = arith.constant 0 : index
    %c0_45 = arith.constant 0 : index
    %c0_46 = arith.constant 0 : index
    %103 = vector.load %arg14[%c0_44, %c0_45, %c0_46] : memref<1x16x128xf32, #tpu.memory_space<vmem>>, vector<1x16x128xf32>
    %104 = vector.shape_cast %103 : vector<1x16x128xf32> to vector<16x128xf32>
    %105 = vector.shape_cast %102 : vector<16x128xf32> to vector<1x16x128xf32>
    tpu.vector_store %arg14[%c0_44, %c0_45, %c0_46], %105 {strides = array<i32>} : memref<1x16x128xf32, #tpu.memory_space<vmem>>, vector<1x16x128xf32>,
    return
  }
  func.func @transform_0(%arg0: i32) -> (i32, i32, i32) {
    %c0_i32 = arith.constant 0 : i32
    %c0_i32_0 = arith.constant 0 : i32
    %c0_i32_1 = arith.constant 0 : i32
    return %arg0, %c0_i32, %c0_i32_0 : i32, i32, i32
  }
  func.func @transform_1(%arg0: i32) -> (i32, i32) {
    %c0_i32 = arith.constant 0 : i32
    %c0_i32_0 = arith.constant 0 : i32
    %c0_i32_1 = arith.constant 0 : i32
    return %c0_i32, %c0_i32_0 : i32, i32
  }
  func.func @transform_2(%arg0: i32) -> (i32, i32) {
    %c0_i32 = arith.constant 0 : i32
    %c0_i32_0 = arith.constant 0 : i32
    %c0_i32_1 = arith.constant 0 : i32
    return %c0_i32, %c0_i32_0 : i32, i32
  }
  func.func @transform_3(%arg0: i32) -> (i32, i32) {
    %c0_i32 = arith.constant 0 : i32
    %c0_i32_0 = arith.constant 0 : i32
    %c0_i32_1 = arith.constant 0 : i32
    return %c0_i32, %c0_i32_0 : i32, i32
  }
  func.func @transform_4(%arg0: i32) -> (i32, i32) {
    %c0_i32 = arith.constant 0 : i32
    %c0_i32_0 = arith.constant 0 : i32
    %c0_i32_1 = arith.constant 0 : i32
    return %c0_i32, %c0_i32_0 : i32, i32
  }
  func.func @transform_5(%arg0: i32) -> (i32, i32) {
    %c0_i32 = arith.constant 0 : i32
    %c0_i32_0 = arith.constant 0 : i32
    %c0_i32_1 = arith.constant 0 : i32
    return %c0_i32, %c0_i32_0 : i32, i32
  }
  func.func @transform_6(%arg0: i32) -> (i32, i32) {
    %c0_i32 = arith.constant 0 : i32
    %c0_i32_0 = arith.constant 0 : i32
    %c0_i32_1 = arith.constant 0 : i32
    return %c0_i32, %c0_i32_0 : i32, i32
  }
  func.func @transform_7(%arg0: i32) -> (i32, i32) {
    %c0_i32 = arith.constant 0 : i32
    %c0_i32_0 = arith.constant 0 : i32
    %c0_i32_1 = arith.constant 0 : i32
    return %c0_i32, %c0_i32_0 : i32, i32
  }
  func.func @transform_8(%arg0: i32) -> (i32, i32) {
    %c0_i32 = arith.constant 0 : i32
    %c0_i32_0 = arith.constant 0 : i32
    %c0_i32_1 = arith.constant 0 : i32
    return %c0_i32, %c0_i32_0 : i32, i32
  }
  func.func @transform_9(%arg0: i32) -> (i32, i32) {
    %c0_i32 = arith.constant 0 : i32
    %c0_i32_0 = arith.constant 0 : i32
    %c0_i32_1 = arith.constant 0 : i32
    return %c0_i32, %c0_i32_0 : i32, i32
  }
  func.func @transform_10(%arg0: i32) -> (i32, i32) {
    %c0_i32 = arith.constant 0 : i32
    %c0_i32_0 = arith.constant 0 : i32
    %c0_i32_1 = arith.constant 0 : i32
    return %c0_i32, %c0_i32_0 : i32, i32
  }
  func.func @transform_11(%arg0: i32) -> (i32, i32) {
    %c0_i32 = arith.constant 0 : i32
    %c0_i32_0 = arith.constant 0 : i32
    %c0_i32_1 = arith.constant 0 : i32
    return %c0_i32, %c0_i32_0 : i32, i32
  }
  func.func @transform_12(%arg0: i32) -> (i32, i32) {
    %c0_i32 = arith.constant 0 : i32
    %c0_i32_0 = arith.constant 0 : i32
    %c0_i32_1 = arith.constant 0 : i32
    return %c0_i32, %c0_i32_0 : i32, i32
  }
  func.func @transform_13(%arg0: i32) -> (i32, i32, i32) {
    %c0_i32 = arith.constant 0 : i32
    %c0_i32_0 = arith.constant 0 : i32
    %c0_i32_1 = arith.constant 0 : i32
    return %arg0, %c0_i32, %c0_i32_0 : i32, i32, i32
  }
}

</mosaic_0001>

<llo_original>
// kernel: tpu_custom_call.1
$region0: #{tpu_custom_call.1}
  #allocation0 [shape = 'u32[]', space=smem, size = 0x4, offset = 0x4, fixed_abs, tag = 'smem constant byte address 0x4 - core index']
  #allocation1 [shape = 'u32[144,128]{1,0:T(1,128)}', space=vmem, size = 0x12000, scoped, tag = 'internal scratch']
  %s0 = inlined_call_operand.hbm [shape: f32[2,16,128], index: 0, kind: input, shape index: {}]
  %s1 = inlined_call_operand.hbm [shape: bf16[128,384], index: 1, kind: input, shape index: {}]
  %s2 = inlined_call_operand.vmem [shape: f32[1,384], index: 2, kind: input, shape index: {}]
  %s3 = inlined_call_operand.hbm [shape: bf16[128,128], index: 3, kind: input, shape index: {}]
  %s4 = inlined_call_operand.vmem [shape: f32[1,128], index: 4, kind: input, shape index: {}]
  %s5 = inlined_call_operand.vmem [shape: f32[1,128], index: 5, kind: input, shape index: {}]
  %s6 = inlined_call_operand.vmem [shape: f32[1,128], index: 6, kind: input, shape index: {}]
  %s7 = inlined_call_operand.hbm [shape: bf16[128,256], index: 7, kind: input, shape index: {}]
  %s8 = inlined_call_operand.vmem [shape: f32[1,256], index: 8, kind: input, shape index: {}]
  %s9 = inlined_call_operand.hbm [shape: bf16[256,128], index: 9, kind: input, shape index: {}]
  %s10 = inlined_call_operand.vmem [shape: f32[1,128], index: 10, kind: input, shape index: {}]
  %s11 = inlined_call_operand.vmem [shape: f32[1,128], index: 11, kind: input, shape index: {}]
  %s12 = inlined_call_operand.vmem [shape: f32[1,128], index: 12, kind: input, shape index: {}]
  %s13 = inlined_call_operand.hbm [shape: f32[2,16,128], index: 13, kind: output, shape index: {}]
  %s14 = sld [smem:[#allocation0]]
  $region105: #{tpu_custom_call.1} parent=0
    _
  %s16 = ssub.s32 1, %s14
  %s17 = scalar_select 0, %s16, %s14
  $region1: #{tpu_custom_call.1} parent=0
    #allocation2 [shape = 'u8[16384]{0}', space=vmem, size = 0x4000, scoped, tag = 'input window, operand 0']
    #allocation3 [shape = 's32[2]{0}', space=sflag, size = 0x8, scoped, tag = 'scoped memory for tpu_custom_call.1']
    #allocation4 [shape = 's32[2]{0}', space=sflag, size = 0x8, scoped, tag = 'scoped memory for tpu_custom_call.1']
    #allocation5 [shape = 'u8[98304]{0}', space=vmem, size = 0x18000, scoped, tag = 'input window, operand 1, single buffered']
    #allocation6 [shape = 's32[1]{0}', space=sflag, size = 0x4, scoped, tag = 'scoped memory for tpu_custom_call.1']
    #allocation7 [shape = 'u8[32768]{0}', space=vmem, size = 0x8000, scoped, tag = 'input window, operand 3, single buffered']
    #allocation8 [shape = 'u8[65536]{0}', space=vmem, size = 0x10000, scoped, tag = 'input window, operand 7, single buffered']
    #allocation9 [shape = 's32[1]{0}', space=sflag, size = 0x4, scoped, tag = 'scoped memory for tpu_custom_call.1']
    #allocation10 [shape = 'u8[65536]{0}', space=vmem, size = 0x10000, scoped, tag = 'input window, operand 9, single buffered']
    #allocation11 [shape = 'u8[16384]{0}', space=vmem, size = 0x4000, scoped, tag = 'output window, operand 0']
    %18 = vsyncpa [#allocation3], 0
    %s19 = scalar_lea.sflag [#allocation3], 1
    %20 = vsyncpa %s19, 0
    %21 = vsyncpa [#allocation6], 0
    %22 = vsyncpa [#allocation9], 0
    %23 = vsyncpa [#allocation4], 0
    %s24 = scalar_lea.sflag [#allocation4], 1
    %25 = vsyncpa %s24, 0
    loop: start=0, step=1, limit=4
    $region2: #{tpu_custom_call.1} parent=1 // loop_pre_header
      _
    $region3: #{tpu_custom_call.1} parent=1 // loop_header
      %s27 = sphi 0, %s31
      %p28 = scmp.ge.s32.totalorder %s27, 4
      %s37 = sphi 0, %s39
      %s40 = sphi 0, %s37
      %s41 = sphi 0, %s40
      %s57 = sphi 0, %s41
      %s61 = sphi 0, %s61
      %s63 = sphi 0, %s61
      %s64 = sphi 0, %s63
      %s78 = sphi 0, %s64
      %s82 = sphi 0, %s82
      %s84 = sphi 0, %s82
      %s85 = sphi 0, %s84
      %s99 = sphi 0, %s85
      %s103 = sphi 0, %s103
      %s105 = sphi 0, %s103
      %s106 = sphi 0, %s105
      %s120 = sphi 0, %s106
      %s124 = sphi 0, %s124
      %s126 = sphi 0, %s124
      %s127 = sphi 0, %s126
      %s141 = sphi 0, %s127
      %s145 = sphi 0, %s145
      %s147 = sphi 0, %s145
      %s148 = sphi 0, %s147
      %s162 = sphi 0, %s148
      %s166 = sphi 0, %s166
      %s168 = sphi 0, %s166
      %s169 = sphi 0, %s168
      %s183 = sphi 0, %s169
      %s187 = sphi 0, %s187
      %s189 = sphi 0, %s187
      %s190 = sphi 0, %s189
      %s204 = sphi 0, %s190
      %s208 = sphi 0, %s208
      %s210 = sphi 0, %s208
      %s211 = sphi 0, %s210
      %s225 = sphi 0, %s211
      %s229 = sphi 0, %s229
      %s231 = sphi 0, %s229
      %s232 = sphi 0, %s231
      %s246 = sphi 0, %s232
      %s250 = sphi 0, %s250
      %s252 = sphi 0, %s250
      %s253 = sphi 0, %s252
      %s267 = sphi 0, %s253
      %s271 = sphi 0, %s271
      %s273 = sphi 0, %s271
      %s274 = sphi 0, %s273
      %s288 = sphi 0, %s274
      %s292 = sphi 0, %s292
      %s294 = sphi 0, %s292
      %s295 = sphi 0, %s294
      %s309 = sphi 0, %s295
      %s315 = sphi 0, %s317
      %s318 = sphi 0, %s315
      %s319 = sphi 0, %s318
      %s335 = sphi 0, %s319
    $region4: #{tpu_custom_call.1} parent=1 // loop_header_branch
      %30 = sbr.rel (%p28) target = $region8
    $region5: #{tpu_custom_call.1} parent=1 // loop_body
      %s32 = ssub.s32 %s27, 1
      %s33 = ssub.s32 %s27, 2
      %s34 = sadd.s32 %s27, 1
      %s35 = ssub.s32 %s27, %s34
      %p36 = scmp.eq.s32.totalorder %s35, 0
      %s38 = sadd.s32 %s37, 1
      %s39 = scalar_select %p36, %s37, %s38
      %p42 = pneg %p36
      %p43 = scmp.eq.s32.totalorder %s27, 1
      %p44 = por %p42, %p43
      %p45 = scmp.ne.s32.totalorder %s37, %s40
      %p46 = scmp.eq.s32.totalorder %s27, 0
      %p47 = por %p45, %p46
      %p48 = scmp.ne.s32.totalorder %s37, %s40
      %p49 = scmp.eq.s32.totalorder %s32, 1
      %p50 = por %p48, %p49
      %p51 = scmp.ne.s32.totalorder %s40, %s41
      %p52 = scmp.eq.s32.totalorder %s32, 0
      %p53 = por %p51, %p52
      %p54 = scmp.ne.s32.totalorder %s40, %s41
      %p55 = scmp.eq.s32.totalorder %s33, 1
      %p56 = por %p54, %p55
      %p58 = scmp.ne.s32.totalorder %s41, %s57
      %p59 = scmp.eq.s32.totalorder %s33, 0
      %p60 = por %p58, %p59
      %s62 = sadd.s32 %s61, 1
      %p65 = scmp.eq.s32.totalorder %s27, 1
      %p66 = scmp.ne.s32.totalorder %s61, %s63
      %p67 = scmp.eq.s32.totalorder %s27, 0
      %p68 = por %p66, %p67
      %p69 = scmp.ne.s32.totalorder %s61, %s63
      %p70 = scmp.eq.s32.totalorder %s32, 1
      %p71 = por %p69, %p70
      %p72 = scmp.ne.s32.totalorder %s63, %s64
      %p73 = scmp.eq.s32.totalorder %s32, 0
      %p74 = por %p72, %p73
      %p75 = scmp.ne.s32.totalorder %s63, %s64
      %p76 = scmp.eq.s32.totalorder %s33, 1
      %p77 = por %p75, %p76
      %p79 = scmp.ne.s32.totalorder %s64, %s78
      %p80 = scmp.eq.s32.totalorder %s33, 0
      %p81 = por %p79, %p80
      %s83 = sadd.s32 %s82, 1
      %p86 = scmp.eq.s32.totalorder %s27, 1
      %p87 = scmp.ne.s32.totalorder %s82, %s84
      %p88 = scmp.eq.s32.totalorder %s27, 0
      %p89 = por %p87, %p88
      %p90 = scmp.ne.s32.totalorder %s82, %s84
      %p91 = scmp.eq.s32.totalorder %s32, 1
      %p92 = por %p90, %p91
      %p93 = scmp.ne.s32.totalorder %s84, %s85
      %p94 = scmp.eq.s32.totalorder %s32, 0
      %p95 = por %p93, %p94
      %p96 = scmp.ne.s32.totalorder %s84, %s85
      %p97 = scmp.eq.s32.totalorder %s33, 1
      %p98 = por %p96, %p97
      %p100 = scmp.ne.s32.totalorder %s85, %s99
      %p101 = scmp.eq.s32.totalorder %s33, 0
      %p102 = por %p100, %p101
      %s104 = sadd.s32 %s103, 1
      %p107 = scmp.eq.s32.totalorder %s27, 1
      %p108 = scmp.ne.s32.totalorder %s103, %s105
      %p109 = scmp.eq.s32.totalorder %s27, 0
      %p110 = por %p108, %p109
      %p111 = scmp.ne.s32.totalorder %s103, %s105
      %p112 = scmp.eq.s32.totalorder %s32, 1
      %p113 = por %p111, %p112
      %p114 = scmp.ne.s32.totalorder %s105, %s106
      %p115 = scmp.eq.s32.totalorder %s32, 0
      %p116 = por %p114, %p115
      %p117 = scmp.ne.s32.totalorder %s105, %s106
      %p118 = scmp.eq.s32.totalorder %s33, 1
      %p119 = por %p117, %p118
      %p121 = scmp.ne.s32.totalorder %s106, %s120
      %p122 = scmp.eq.s32.totalorder %s33, 0
      %p123 = por %p121, %p122
      %s125 = sadd.s32 %s124, 1
      %p128 = scmp.eq.s32.totalorder %s27, 1
      %p129 = scmp.ne.s32.totalorder %s124, %s126
      %p130 = scmp.eq.s32.totalorder %s27, 0
      %p131 = por %p129, %p130
      %p132 = scmp.ne.s32.totalorder %s124, %s126
      %p133 = scmp.eq.s32.totalorder %s32, 1
      %p134 = por %p132, %p133
      %p135 = scmp.ne.s32.totalorder %s126, %s127
      %p136 = scmp.eq.s32.totalorder %s32, 0
      %p137 = por %p135, %p136
      %p138 = scmp.ne.s32.totalorder %s126, %s127
      %p139 = scmp.eq.s32.totalorder %s33, 1
      %p140 = por %p138, %p139
      %p142 = scmp.ne.s32.totalorder %s127, %s141
      %p143 = scmp.eq.s32.totalorder %s33, 0
      %p144 = por %p142, %p143
      %s146 = sadd.s32 %s145, 1
      %p149 = scmp.eq.s32.totalorder %s27, 1
      %p150 = scmp.ne.s32.totalorder %s145, %s147
      %p151 = scmp.eq.s32.totalorder %s27, 0
      %p152 = por %p150, %p151
      %p153 = scmp.ne.s32.totalorder %s145, %s147
      %p154 = scmp.eq.s32.totalorder %s32, 1
      %p155 = por %p153, %p154
      %p156 = scmp.ne.s32.totalorder %s147, %s148
      %p157 = scmp.eq.s32.totalorder %s32, 0
      %p158 = por %p156, %p157
      %p159 = scmp.ne.s32.totalorder %s147, %s148
      %p160 = scmp.eq.s32.totalorder %s33, 1
      %p161 = por %p159, %p160
      %p163 = scmp.ne.s32.totalorder %s148, %s162
      %p164 = scmp.eq.s32.totalorder %s33, 0
      %p165 = por %p163, %p164
      %s167 = sadd.s32 %s166, 1
      %p170 = scmp.eq.s32.totalorder %s27, 1
      %p171 = scmp.ne.s32.totalorder %s166, %s168
      %p172 = scmp.eq.s32.totalorder %s27, 0
      %p173 = por %p171, %p172
      %p174 = scmp.ne.s32.totalorder %s166, %s168
      %p175 = scmp.eq.s32.totalorder %s32, 1
      %p176 = por %p174, %p175
      %p177 = scmp.ne.s32.totalorder %s168, %s169
      %p178 = scmp.eq.s32.totalorder %s32, 0
      %p179 = por %p177, %p178
      %p180 = scmp.ne.s32.totalorder %s168, %s169
      %p181 = scmp.eq.s32.totalorder %s33, 1
      %p182 = por %p180, %p181
      %p184 = scmp.ne.s32.totalorder %s169, %s183
      %p185 = scmp.eq.s32.totalorder %s33, 0
      %p186 = por %p184, %p185
      %s188 = sadd.s32 %s187, 1
      %p191 = scmp.eq.s32.totalorder %s27, 1
      %p192 = scmp.ne.s32.totalorder %s187, %s189
      %p193 = scmp.eq.s32.totalorder %s27, 0
      %p194 = por %p192, %p193
      %p195 = scmp.ne.s32.totalorder %s187, %s189
      %p196 = scmp.eq.s32.totalorder %s32, 1
      %p197 = por %p195, %p196
      %p198 = scmp.ne.s32.totalorder %s189, %s190
      %p199 = scmp.eq.s32.totalorder %s32, 0
      %p200 = por %p198, %p199
      %p201 = scmp.ne.s32.totalorder %s189, %s190
      %p202 = scmp.eq.s32.totalorder %s33, 1
      %p203 = por %p201, %p202
      %p205 = scmp.ne.s32.totalorder %s190, %s204
      %p206 = scmp.eq.s32.totalorder %s33, 0
      %p207 = por %p205, %p206
      %s209 = sadd.s32 %s208, 1
      %p212 = scmp.eq.s32.totalorder %s27, 1
      %p213 = scmp.ne.s32.totalorder %s208, %s210
      %p214 = scmp.eq.s32.totalorder %s27, 0
      %p215 = por %p213, %p214
      %p216 = scmp.ne.s32.totalorder %s208, %s210
      %p217 = scmp.eq.s32.totalorder %s32, 1
      %p218 = por %p216, %p217
      %p219 = scmp.ne.s32.totalorder %s210, %s211
      %p220 = scmp.eq.s32.totalorder %s32, 0
      %p221 = por %p219, %p220
      %p222 = scmp.ne.s32.totalorder %s210, %s211
      %p223 = scmp.eq.s32.totalorder %s33, 1
      %p224 = por %p222, %p223
      %p226 = scmp.ne.s32.totalorder %s211, %s225
      %p227 = scmp.eq.s32.totalorder %s33, 0
      %p228 = por %p226, %p227
      %s230 = sadd.s32 %s229, 1
      %p233 = scmp.eq.s32.totalorder %s27, 1
      %p234 = scmp.ne.s32.totalorder %s229, %s231
      %p235 = scmp.eq.s32.totalorder %s27, 0
      %p236 = por %p234, %p235
      %p237 = scmp.ne.s32.totalorder %s229, %s231
      %p238 = scmp.eq.s32.totalorder %s32, 1
      %p239 = por %p237, %p238
      %p240 = scmp.ne.s32.totalorder %s231, %s232
      %p241 = scmp.eq.s32.totalorder %s32, 0
      %p242 = por %p240, %p241
      %p243 = scmp.ne.s32.totalorder %s231, %s232
      %p244 = scmp.eq.s32.totalorder %s33, 1
      %p245 = por %p243, %p244
      %p247 = scmp.ne.s32.totalorder %s232, %s246
      %p248 = scmp.eq.s32.totalorder %s33, 0
      %p249 = por %p247, %p248
      %s251 = sadd.s32 %s250, 1
      %p254 = scmp.eq.s32.totalorder %s27, 1
      %p255 = scmp.ne.s32.totalorder %s250, %s252
      %p256 = scmp.eq.s32.totalorder %s27, 0
      %p257 = por %p255, %p256
      %p258 = scmp.ne.s32.totalorder %s250, %s252
      %p259 = scmp.eq.s32.totalorder %s32, 1
      %p260 = por %p258, %p259
      %p261 = scmp.ne.s32.totalorder %s252, %s253
      %p262 = scmp.eq.s32.totalorder %s32, 0
      %p263 = por %p261, %p262
      %p264 = scmp.ne.s32.totalorder %s252, %s253
      %p265 = scmp.eq.s32.totalorder %s33, 1
      %p266 = por %p264, %p265
      %p268 = scmp.ne.s32.totalorder %s253, %s267
      %p269 = scmp.eq.s32.totalorder %s33, 0
      %p270 = por %p268, %p269
      %s272 = sadd.s32 %s271, 1
      %p275 = scmp.eq.s32.totalorder %s27, 1
      %p276 = scmp.ne.s32.totalorder %s271, %s273
      %p277 = scmp.eq.s32.totalorder %s27, 0
      %p278 = por %p276, %p277
      %p279 = scmp.ne.s32.totalorder %s271, %s273
      %p280 = scmp.eq.s32.totalorder %s32, 1
      %p281 = por %p279, %p280
      %p282 = scmp.ne.s32.totalorder %s273, %s274
      %p283 = scmp.eq.s32.totalorder %s32, 0
      %p284 = por %p282, %p283
      %p285 = scmp.ne.s32.totalorder %s273, %s274
      %p286 = scmp.eq.s32.totalorder %s33, 1
      %p287 = por %p285, %p286
      %p289 = scmp.ne.s32.totalorder %s274, %s288
      %p290 = scmp.eq.s32.totalorder %s33, 0
      %p291 = por %p289, %p290
      %s293 = sadd.s32 %s292, 1
      %p296 = scmp.eq.s32.totalorder %s27, 1
      %p297 = scmp.ne.s32.totalorder %s292, %s294
      %p298 = scmp.eq.s32.totalorder %s27, 0
      %p299 = por %p297, %p298
      %p300 = scmp.ne.s32.totalorder %s292, %s294
      %p301 = scmp.eq.s32.totalorder %s32, 1
      %p302 = por %p300, %p301
      %p303 = scmp.ne.s32.totalorder %s294, %s295
      %p304 = scmp.eq.s32.totalorder %s32, 0
      %p305 = por %p303, %p304
      %p306 = scmp.ne.s32.totalorder %s294, %s295
      %p307 = scmp.eq.s32.totalorder %s33, 1
      %p308 = por %p306, %p307
      %p310 = scmp.ne.s32.totalorder %s295, %s309
      %p311 = scmp.eq.s32.totalorder %s33, 0
      %p312 = por %p310, %p311
      %s313 = ssub.s32 %s27, %s34
      %p314 = scmp.eq.s32.totalorder %s313, 0
      %s316 = sadd.s32 %s315, 1
      %s317 = scalar_select %p314, %s315, %s316
      %p320 = pneg %p314
      %p321 = scmp.eq.s32.totalorder %s27, 1
      %p322 = por %p320, %p321
      %p323 = scmp.ne.s32.totalorder %s315, %s318
      %p324 = scmp.eq.s32.totalorder %s27, 0
      %p325 = por %p323, %p324
      %p326 = scmp.ne.s32.totalorder %s315, %s318
      %p327 = scmp.eq.s32.totalorder %s32, 1
      %p328 = por %p326, %p327
      %p329 = scmp.ne.s32.totalorder %s318, %s319
      %p330 = scmp.eq.s32.totalorder %s32, 0
      %p331 = por %p329, %p330
      %p332 = scmp.ne.s32.totalorder %s318, %s319
      %p333 = scmp.eq.s32.totalorder %s33, 1
      %p334 = por %p332, %p333
      %p336 = scmp.ne.s32.totalorder %s319, %s335
      %p337 = scmp.eq.s32.totalorder %s33, 0
      %p338 = por %p336, %p337
      %p339 = scmp.le.s32.totalorder 1, %s27
      %p340 = scmp.lt.s32.totalorder %s27, 3
      %p341 = pnand %p339, %p340
      %p342 = pneg %p341
      // Predicated region
      $region9: #{tpu_custom_call.1} parent=5 // pred_check
        _
      $region10: #{tpu_custom_call.1} parent=5 // pred_check_branch
        %344 = sbr.rel (%p341) target = $region12
      $region11: #{tpu_custom_call.1} parent=5 // pred_region
        %s345 = ssub.s32 %s27, 1
        // Predicated region
        $region13: #{tpu_custom_call.1} parent=11 // pred_check
          %p346 = pneg %p74
        $region14: #{tpu_custom_call.1} parent=11 // pred_check_branch
          %348 = sbr.rel (%p346) target = $region16
        $region15: #{tpu_custom_call.1} parent=11 // pred_region
          %s350 = ssub.s32 3072, 3072
          %351 = vsyncadd [#allocation6], %s350
          %s352 = sshll.u32 [#allocation5], 4
          %s353 = int_to_ptr.vmem [resolvable:$true] %s352
          %358 = dma.hbm_to_vmem [thread:$0]  %s1, 3072, %s353, [#allocation6], 192, 192, 12
        $region16: #{tpu_custom_call.1} parent=11 // pred_fallthru
          _
        // Predicated region
        $region17: #{tpu_custom_call.1} parent=11 // pred_check
          %p359 = pneg %p95
        $region18: #{tpu_custom_call.1} parent=11 // pred_check_branch
          %361 = sbr.rel (%p359) target = $region20
        $region19: #{tpu_custom_call.1} parent=11 // pred_region
          _
        $region20: #{tpu_custom_call.1} parent=11 // pred_fallthru
          _
        // Predicated region
        $region21: #{tpu_custom_call.1} parent=11 // pred_check
          %p362 = pneg %p116
        $region22: #{tpu_custom_call.1} parent=11 // pred_check_branch
          %364 = sbr.rel (%p362) target = $region24
        $region23: #{tpu_custom_call.1} parent=11 // pred_region
          %s366 = ssub.s32 1024, 1024
          %367 = vsyncadd [#allocation6], %s366
          %s368 = sshll.u32 [#allocation7], 4
          %s369 = int_to_ptr.vmem [resolvable:$true] %s368
          %374 = dma.hbm_to_vmem [thread:$0]  %s3, 1024, %s369, [#allocation6], 64, 64, 4
        $region24: #{tpu_custom_call.1} parent=11 // pred_fallthru
          _
        // Predicated region
        $region25: #{tpu_custom_call.1} parent=11 // pred_check
          %p375 = pneg %p137
        $region26: #{tpu_custom_call.1} parent=11 // pred_check_branch
          %377 = sbr.rel (%p375) target = $region28
        $region27: #{tpu_custom_call.1} parent=11 // pred_region
          _
        $region28: #{tpu_custom_call.1} parent=11 // pred_fallthru
          _
        // Predicated region
        $region29: #{tpu_custom_call.1} parent=11 // pred_check
          %p378 = pneg %p158
        $region30: #{tpu_custom_call.1} parent=11 // pred_check_branch
          %380 = sbr.rel (%p378) target = $region32
        $region31: #{tpu_custom_call.1} parent=11 // pred_region
          _
        $region32: #{tpu_custom_call.1} parent=11 // pred_fallthru
          _
        // Predicated region
        $region33: #{tpu_custom_call.1} parent=11 // pred_check
          %p381 = pneg %p179
        $region34: #{tpu_custom_call.1} parent=11 // pred_check_branch
          %383 = sbr.rel (%p381) target = $region36
        $region35: #{tpu_custom_call.1} parent=11 // pred_region
          _
        $region36: #{tpu_custom_call.1} parent=11 // pred_fallthru
          _
        // Predicated region
        $region37: #{tpu_custom_call.1} parent=11 // pred_check
          %p384 = pneg %p200
        $region38: #{tpu_custom_call.1} parent=11 // pred_check_branch
          %386 = sbr.rel (%p384) target = $region40
        $region39: #{tpu_custom_call.1} parent=11 // pred_region
          %s388 = ssub.s32 2048, 2048
          %389 = vsyncadd [#allocation9], %s388
          %s390 = sshll.u32 [#allocation8], 4
          %s391 = int_to_ptr.vmem [resolvable:$true] %s390
          %396 = dma.hbm_to_vmem [thread:$0]  %s7, 2048, %s391, [#allocation9], 128, 128, 8
        $region40: #{tpu_custom_call.1} parent=11 // pred_fallthru
          _
        // Predicated region
        $region41: #{tpu_custom_call.1} parent=11 // pred_check
          %p397 = pneg %p221
        $region42: #{tpu_custom_call.1} parent=11 // pred_check_branch
          %399 = sbr.rel (%p397) target = $region44
        $region43: #{tpu_custom_call.1} parent=11 // pred_region
          _
        $region44: #{tpu_custom_call.1} parent=11 // pred_fallthru
          _
        // Predicated region
        $region45: #{tpu_custom_call.1} parent=11 // pred_check
          %p400 = pneg %p242
        $region46: #{tpu_custom_call.1} parent=11 // pred_check_branch
          %402 = sbr.rel (%p400) target = $region48
        $region47: #{tpu_custom_call.1} parent=11 // pred_region
          %s404 = ssub.s32 2048, 2048
          %405 = vsyncadd [#allocation9], %s404
          %s406 = sshll.u32 [#allocation10], 4
          %s407 = int_to_ptr.vmem [resolvable:$true] %s406
          %412 = dma.hbm_to_vmem [thread:$0]  %s9, 2048, %s407, [#allocation9], 64, 64, 4
        $region48: #{tpu_custom_call.1} parent=11 // pred_fallthru
          _
        // Predicated region
        $region49: #{tpu_custom_call.1} parent=11 // pred_check
          %p413 = pneg %p263
        $region50: #{tpu_custom_call.1} parent=11 // pred_check_branch
          %415 = sbr.rel (%p413) target = $region52
        $region51: #{tpu_custom_call.1} parent=11 // pred_region
          _
        $region52: #{tpu_custom_call.1} parent=11 // pred_fallthru
          _
        // Predicated region
        $region53: #{tpu_custom_call.1} parent=11 // pred_check
          %p416 = pneg %p284
        $region54: #{tpu_custom_call.1} parent=11 // pred_check_branch
          %418 = sbr.rel (%p416) target = $region56
        $region55: #{tpu_custom_call.1} parent=11 // pred_region
          _
        $region56: #{tpu_custom_call.1} parent=11 // pred_fallthru
          _
        // Predicated region
        $region57: #{tpu_custom_call.1} parent=11 // pred_check
          %p419 = pneg %p305
        $region58: #{tpu_custom_call.1} parent=11 // pred_check_branch
          %421 = sbr.rel (%p419) target = $region60
        $region59: #{tpu_custom_call.1} parent=11 // pred_region
          _
        $region60: #{tpu_custom_call.1} parent=11 // pred_fallthru
          _
      $region12: #{tpu_custom_call.1} parent=5 // pred_fallthru
        _
      %p422 = scmp.lt.s32.totalorder %s27, 2
      // Predicated region
      $region61: #{tpu_custom_call.1} parent=5 // pred_check
        %p423 = pneg %p422
      $region62: #{tpu_custom_call.1} parent=5 // pred_check_branch
        %425 = sbr.rel (%p423) target = $region64
      $region63: #{tpu_custom_call.1} parent=5 // pred_region
        // Predicated region
        $region65: #{tpu_custom_call.1} parent=63 // pred_check
          %p426 = pneg %p47
        $region66: #{tpu_custom_call.1} parent=63 // pred_check_branch
          %428 = sbr.rel (%p426) target = $region68
        $region67: #{tpu_custom_call.1} parent=63 // pred_region
          %s429 = sand.u32 %s37, 1
          %s430 = scalar_lea.sflag [#allocation3], %s429
          %s431 = sand.u32 %s37, 1
          %s432 = smul.addr %s431, 16
          %s433 = scalar_lea.vmem [#allocation2], %s432
          %s435 = ssub.s32 256, 256
          %436 = vsyncadd %s430, %s435
          %s437 = smul.addr %s27, 2
          %s438 = smul.addr %s437, 128
          %s439 = scalar_lea.hbm %s0, %s438
          %s440 = sshll.u32 %s433, 4
          %s441 = int_to_ptr.vmem [resolvable:$true] %s440
          %446 = dma.hbm_to_vmem [thread:$0]  %s439, 256, %s441, %s430, 128, 128, 8
        $region68: #{tpu_custom_call.1} parent=63 // pred_fallthru
          _
      $region64: #{tpu_custom_call.1} parent=5 // pred_fallthru
        _
      %p447 = scmp.le.s32.totalorder 1, %s27
      %p448 = scmp.lt.s32.totalorder %s27, 3
      %p449 = pnand %p447, %p448
      %p450 = pneg %p449
      // Predicated region
      $region69: #{tpu_custom_call.1} parent=5 // pred_check
        _
      $region70: #{tpu_custom_call.1} parent=5 // pred_check_branch
        %452 = sbr.rel (%p449) target = $region72
      $region71: #{tpu_custom_call.1} parent=5 // pred_region
        %s453 = ssub.s32 %s27, 1
        %s454 = sand.u32 %s40, 1
        %s455 = scalar_lea.sflag [#allocation3], %s454
        %s456 = sand.u32 %s40, 1
        %s457 = smul.addr %s456, 16
        %s458 = scalar_lea.vmem [#allocation2], %s457
        // Predicated region
        $region73: #{tpu_custom_call.1} parent=71 // pred_check
          %p459 = pneg %p53
        $region74: #{tpu_custom_call.1} parent=71 // pred_check_branch
          %461 = sbr.rel (%p459) target = $region76
        $region75: #{tpu_custom_call.1} parent=71 // pred_region
          %462 = dma.done %s455, 256
        $region76: #{tpu_custom_call.1} parent=71 // pred_fallthru
          _
        // Predicated region
        $region77: #{tpu_custom_call.1} parent=71 // pred_check
          %p463 = pneg %p74
        $region78: #{tpu_custom_call.1} parent=71 // pred_check_branch
          %465 = sbr.rel (%p463) target = $region80
        $region79: #{tpu_custom_call.1} parent=71 // pred_region
          %466 = dma.done [#allocation6], 3072
        $region80: #{tpu_custom_call.1} parent=71 // pred_fallthru
          _
        // Predicated region
        $region81: #{tpu_custom_call.1} parent=71 // pred_check
          %p467 = pneg %p116
        $region82: #{tpu_custom_call.1} parent=71 // pred_check_branch
          %469 = sbr.rel (%p467) target = $region84
        $region83: #{tpu_custom_call.1} parent=71 // pred_region
          %470 = dma.done [#allocation6], 1024
        $region84: #{tpu_custom_call.1} parent=71 // pred_fallthru
          _
        // Predicated region
        $region85: #{tpu_custom_call.1} parent=71 // pred_check
          %p471 = pneg %p200
        $region86: #{tpu_custom_call.1} parent=71 // pred_check_branch
          %473 = sbr.rel (%p471) target = $region88
        $region87: #{tpu_custom_call.1} parent=71 // pred_region
          %474 = dma.done [#allocation9], 2048
        $region88: #{tpu_custom_call.1} parent=71 // pred_fallthru
          _
        // Predicated region
        $region89: #{tpu_custom_call.1} parent=71 // pred_check
          %p475 = pneg %p242
        $region90: #{tpu_custom_call.1} parent=71 // pred_check_branch
          %477 = sbr.rel (%p475) target = $region92
        $region91: #{tpu_custom_call.1} parent=71 // pred_region
          %478 = dma.done [#allocation9], 2048
        $region92: #{tpu_custom_call.1} parent=71 // pred_fallthru
          _
        %s479 = sand.u32 %s40, 1
        %s480 = scalar_lea.sflag [#allocation3], %s479
        %s481 = sand.u32 %s40, 1
        %s482 = smul.addr %s481, 16
        %s483 = scalar_lea.vmem [#allocation2], %s482
        %p484 = pneg %p53
        %p485 = pneg %p50
        %p486 = pneg %p74
        %p487 = pneg %p71
        %p488 = pneg %p95
        %p489 = pneg %p92
        %p490 = pneg %p116
        %p491 = pneg %p113
        %p492 = pneg %p137
        %p493 = pneg %p134
        %p494 = pneg %p158
        %p495 = pneg %p155
        %p496 = pneg %p179
        %p497 = pneg %p176
        %p498 = pneg %p200
        %p499 = pneg %p197
        %p500 = pneg %p221
        %p501 = pneg %p218
        %p502 = pneg %p242
        %p503 = pneg %p239
        %p504 = pneg %p263
        %p505 = pneg %p260
        %p506 = pneg %p284
        %p507 = pneg %p281
        %p508 = pneg %p305
        %p509 = pneg %p302
        %p510 = pneg %p331
        %p511 = pneg %p328
        %s512 = sand.u32 %s318, 1
        %s513 = scalar_lea.sflag [#allocation4], %s512
        %s514 = sand.u32 %s318, 1
        %s515 = smul.addr %s514, 16
        %s516 = scalar_lea.vmem [#allocation11], %s515
        %v518 = vld [vmem:[%s458] sm:$0xff]
        %v519 = vld [vmem:[%s458 + $0x8] sm:$0xff]
        %v520 = vpack.c.bf16 %v519, %v518
        %v521 = vld [vmem:[#allocation5] sm:$0xff]
        %v522 = vld [vmem:[#allocation5 + $0x8] sm:$0xf]
        %v523 = vld [vmem:[#allocation5 + $0xc] sm:$0xff]
        %v524 = vld [vmem:[#allocation5 + $0x14] sm:$0xf]
        %v525 = vld [vmem:[#allocation5 + $0x18] sm:$0xff]
        %v526 = vld [vmem:[#allocation5 + $0x20] sm:$0xf]
        %v527 = vld [vmem:[#allocation5 + $0x24] sm:$0xff]
        %v528 = vld [vmem:[#allocation5 + $0x2c] sm:$0xf]
        %v529 = vld [vmem:[#allocation5 + $0x30] sm:$0xff]
        %v530 = vld [vmem:[#allocation5 + $0x38] sm:$0xf]
        %v531 = vld [vmem:[#allocation5 + $0x3c] sm:$0xff]
        %v532 = vld [vmem:[#allocation5 + $0x44] sm:$0xf]
        %v533 = vld [vmem:[#allocation5 + $0x48] sm:$0xff]
        %v534 = vld [vmem:[#allocation5 + $0x50] sm:$0xf]
        %v535 = vld [vmem:[#allocation5 + $0x54] sm:$0xff]
        %v536 = vld [vmem:[#allocation5 + $0x5c] sm:$0xf]
        %v537 = vld [vmem:[#allocation5 + $0x60] sm:$0xff]
        %v538 = vld [vmem:[#allocation5 + $0x68] sm:$0xf]
        %v539 = vld [vmem:[#allocation5 + $0x6c] sm:$0xff]
        %v540 = vld [vmem:[#allocation5 + $0x74] sm:$0xf]
        %v541 = vld [vmem:[#allocation5 + $0x78] sm:$0xff]
        %v542 = vld [vmem:[#allocation5 + $0x80] sm:$0xf]
        %v543 = vld [vmem:[#allocation5 + $0x84] sm:$0xff]
        %v544 = vld [vmem:[#allocation5 + $0x8c] sm:$0xf]
        %v545 = vld [vmem:[#allocation5 + $0x90] sm:$0xff]
        %v546 = vld [vmem:[#allocation5 + $0x98] sm:$0xf]
        %v547 = vld [vmem:[#allocation5 + $0x9c] sm:$0xff]
        %v548 = vld [vmem:[#allocation5 + $0xa4] sm:$0xf]
        %v549 = vld [vmem:[#allocation5 + $0xa8] sm:$0xff]
        %v550 = vld [vmem:[#allocation5 + $0xb0] sm:$0xf]
        %v551 = vld [vmem:[#allocation5 + $0xb4] sm:$0xff]
        %v552 = vld [vmem:[#allocation5 + $0xbc] sm:$0xf]
        %v553 = vld [vmem:[%s2] sm:$0x7]
        %v555 = vlaneseq
        %v556 = vshrl.u32 %v555, 7
        %v557 = vsub.s32 0, %v556
        %v558 = vrot.slane %v553, %v557
        %v559 = vlaneseq
        %v560 = vshrl.u32 %v559, 7
        %v561 = vsub.s32 1, %v560
        %v562 = vrot.slane %v553, %v561
        %v563 = vlaneseq
        %v564 = vshrl.u32 %v563, 7
        %v565 = vsub.s32 2, %v564
        %v566 = vrot.slane %v553, %v565
        %v602 = vunpack.c.l.b16 %v521
        %v603 = vunpack.c.h.b16 %v521
        %v604 = vunpack.c.l.b16 %v522
        %v605 = vunpack.c.l.b16 %v523
        %v606 = vunpack.c.h.b16 %v523
        %v607 = vunpack.c.l.b16 %v524
        %v608 = vunpack.c.l.b16 %v525
        %v609 = vunpack.c.h.b16 %v525
        %v610 = vunpack.c.l.b16 %v526
        %v611 = vunpack.c.l.b16 %v527
        %v612 = vunpack.c.h.b16 %v527
        %v613 = vunpack.c.l.b16 %v528
        %v614 = vunpack.c.l.b16 %v529
        %v615 = vunpack.c.h.b16 %v529
        %v616 = vunpack.c.l.b16 %v530
        %v617 = vunpack.c.l.b16 %v531
        %v618 = vunpack.c.h.b16 %v531
        %v619 = vunpack.c.l.b16 %v532
        %v620 = vunpack.c.l.b16 %v533
        %v621 = vunpack.c.h.b16 %v533
        %v622 = vunpack.c.l.b16 %v534
        %v623 = vunpack.c.l.b16 %v535
        %v624 = vunpack.c.h.b16 %v535
        %v625 = vunpack.c.l.b16 %v536
        %v626 = vunpack.c.l.b16 %v537
        %v627 = vunpack.c.h.b16 %v537
        %v628 = vunpack.c.l.b16 %v538
        %v629 = vunpack.c.l.b16 %v539
        %v630 = vunpack.c.h.b16 %v539
        %v631 = vunpack.c.l.b16 %v540
        %v632 = vunpack.c.l.b16 %v541
        %v633 = vunpack.c.h.b16 %v541
        %v634 = vunpack.c.l.b16 %v542
        %v635 = vunpack.c.l.b16 %v543
        %v636 = vunpack.c.h.b16 %v543
        %v637 = vunpack.c.l.b16 %v544
        %v638 = vunpack.c.l.b16 %v545
        %v639 = vunpack.c.h.b16 %v545
        %v640 = vunpack.c.l.b16 %v546
        %v641 = vunpack.c.l.b16 %v547
        %v642 = vunpack.c.h.b16 %v547
        %v643 = vunpack.c.l.b16 %v548
        %v644 = vunpack.c.l.b16 %v549
        %v645 = vunpack.c.h.b16 %v549
        %v646 = vunpack.c.l.b16 %v550
        %v647 = vunpack.c.l.b16 %v551
        %v648 = vunpack.c.h.b16 %v551
        %v649 = vunpack.c.l.b16 %v552
        %v650 = vpack.c.b16 %v605, %v602
        %v651 = vpack.c.b16 %v606, %v603
        %v652 = vpack.c.b16 %v607, %v604
        %v653 = vpack.c.b16 %v611, %v608
        %v654 = vpack.c.b16 %v612, %v609
        %v655 = vpack.c.b16 %v613, %v610
        %v656 = vpack.c.b16 %v617, %v614
        %v657 = vpack.c.b16 %v618, %v615
        %v658 = vpack.c.b16 %v619, %v616
        %v659 = vpack.c.b16 %v623, %v620
        %v660 = vpack.c.b16 %v624, %v621
        %v661 = vpack.c.b16 %v625, %v622
        %v662 = vpack.c.b16 %v629, %v626
        %v663 = vpack.c.b16 %v630, %v627
        %v664 = vpack.c.b16 %v631, %v628
        %v665 = vpack.c.b16 %v635, %v632
        %v666 = vpack.c.b16 %v636, %v633
        %v667 = vpack.c.b16 %v637, %v634
        %v668 = vpack.c.b16 %v641, %v638
        %v669 = vpack.c.b16 %v642, %v639
        %v670 = vpack.c.b16 %v643, %v640
        %v671 = vpack.c.b16 %v647, %v644
        %v672 = vpack.c.b16 %v648, %v645
        %v673 = vpack.c.b16 %v649, %v646
        %698 = vmatprep.subr.bf16.mxu0 %v651
        %699 = vmatpush1.bf16.msra.mxu0 %v650
        %700 = vmatprep.subr.bf16.mxu0 %v654
        %701 = vmatpush1.bf16.msra.mxu0 %v653
        %702 = vmatprep.subr.bf16.mxu0 %v657
        %703 = vmatpush1.bf16.msra.mxu0 %v656
        %704 = vmatprep.subr.bf16.mxu0 %v660
        %705 = vmatpush1.bf16.msra.mxu0 %v659
        %706 = vmatprep.subr.bf16.mxu0 %v663
        %707 = vmatpush1.bf16.msra.mxu0 %v662
        %708 = vmatprep.subr.bf16.mxu0 %v666
        %709 = vmatpush1.bf16.msra.mxu0 %v665
        %710 = vmatprep.subr.bf16.mxu0 %v669
        %711 = vmatpush1.bf16.msra.mxu0 %v668
        %712 = vmatprep.subr.bf16.mxu0 %v672
        %713 = vmatpush1.bf16.msra.mxu0 %v671
        %714 = vmatprep.subr.bf16.mxu0 0
        %715 = vmatpush1.bf16.msra.mxu0 0
        %716 = vmatprep.subr.bf16.mxu0 0
        %717 = vmatpush1.bf16.msra.mxu0 0
        %718 = vmatprep.subr.bf16.mxu0 0
        %719 = vmatpush1.bf16.msra.mxu0 0
        %720 = vmatprep.subr.bf16.mxu0 0
        %721 = vmatpush1.bf16.msra.mxu0 0
        %722 = vmatprep.subr.bf16.mxu0 0
        %723 = vmatpush1.bf16.msra.mxu0 0
        %724 = vmatprep.subr.bf16.mxu0 0
        %725 = vmatpush1.bf16.msra.mxu0 0
        %726 = vmatprep.subr.bf16.mxu0 0
        %727 = vmatpush1.bf16.msra.mxu0 0
        %728 = vmatprep.subr.bf16.mxu0 0
        %729 = vmatpush1.bf16.msra.mxu0 0
        %730 = vmatprep.mubr.bf16.mxu0 0
        %731 = vmatmul.mubr.bf16.gmra.mrb[0].mxu0 %v520
        %v732 = vpop.f32.mrb[0].mxu0
        %v733 = vadd.f32 %v558, %v732
        %v734 = vpop.f32.mrb[0].mxu0
        %v735 = vadd.f32 %v562, %v734
        %v736 = vpop.f32.mrb[0].mxu0
        %v737 = vadd.f32 %v558, %v736
        %v738 = vpop.f32.mrb[0].mxu0
        %v739 = vadd.f32 %v562, %v738
        %740 = vdwg.mxu0
        %741 = vmatprep.subr.bf16.mxu0 0
        %742 = vmatpush1.bf16.msra.mxu0 %v652
        %743 = vmatprep.subr.bf16.mxu0 0
        %744 = vmatpush1.bf16.msra.mxu0 %v655
        %745 = vmatprep.subr.bf16.mxu0 0
        %746 = vmatpush1.bf16.msra.mxu0 %v658
        %747 = vmatprep.subr.bf16.mxu0 0
        %748 = vmatpush1.bf16.msra.mxu0 %v661
        %749 = vmatprep.subr.bf16.mxu0 0
        %750 = vmatpush1.bf16.msra.mxu0 %v664
        %751 = vmatprep.subr.bf16.mxu0 0
        %752 = vmatpush1.bf16.msra.mxu0 %v667
        %753 = vmatprep.subr.bf16.mxu0 0
        %754 = vmatpush1.bf16.msra.mxu0 %v670
        %755 = vmatprep.subr.bf16.mxu0 0
        %756 = vmatpush1.bf16.msra.mxu0 %v673
        %757 = vmatprep.subr.bf16.mxu0 0
        %758 = vmatpush1.bf16.msra.mxu0 0
        %759 = vmatprep.subr.bf16.mxu0 0
        %760 = vmatpush1.bf16.msra.mxu0 0
        %761 = vmatprep.subr.bf16.mxu0 0
        %762 = vmatpush1.bf16.msra.mxu0 0
        %763 = vmatprep.subr.bf16.mxu0 0
        %764 = vmatpush1.bf16.msra.mxu0 0
        %765 = vmatprep.subr.bf16.mxu0 0
        %766 = vmatpush1.bf16.msra.mxu0 0
        %767 = vmatprep.subr.bf16.mxu0 0
        %768 = vmatpush1.bf16.msra.mxu0 0
        %769 = vmatprep.subr.bf16.mxu0 0
        %770 = vmatpush1.bf16.msra.mxu0 0
        %771 = vmatprep.subr.bf16.mxu0 0
        %772 = vmatpush1.bf16.msra.mxu0 0
        %773 = vmatprep.mubr.bf16.mxu0 0
        %774 = vmatmul.mubr.bf16.gmra.mrb[0].mxu0 %v520
        %v775 = vpop.f32.mrb[0].mxu0
        %v776 = vadd.f32 %v566, %v775
        %v777 = vpop.f32.mrb[0].mxu0
        %v778 = vpop.f32.mrb[0].mxu0
        %v779 = vadd.f32 %v566, %v778
        %v780 = vpop.f32.mrb[0].mxu0
        %781 = vdwg.mxu0
        %v782 = vpack.c.bf16 %v737, %v733
        %v783 = vpack.c.bf16 %v739, %v735
        %v784 = vpack.c.bf16 %v779, %v776
        %786 = vrot.lane.b32.xlu0 %v782, 96
        %v787 = vpop.permute.xlu0 %786
        %788 = vrot.lane.b32.xlu0 %v782, 64
        %v789 = vpop.permute.xlu0 %788
        %790 = vrot.lane.b32.xlu0 %v782, 32
        %v791 = vpop.permute.xlu0 %790
        %v794 = vpack.i.b16 %v787, %v782
        %v796 = vshrl.u32 %v782, 16
        %v797 = vshrl.u32 %v787, 16
        %v798 = vpack.i.b16 %v797, %v796
        %v802 = vpack.i.b16 %v791, %v789
        %v804 = vshrl.u32 %v789, 16
        %v805 = vshrl.u32 %v791, 16
        %v806 = vpack.i.b16 %v805, %v804
        %v809 = vpack.i.b16 0, 0
        %v811 = vshrl.u32 0, 16
        %v812 = vpack.i.b16 %v811, %v811
        %v814 = vcombine.high %v794, %v809
        %v816 = vunpack.c.l.s4 1983009808
        %v817 = vunpack.c.0.s8 %v816
        %v818 = vlaneseq
        %v819 = vshrl.u32 %v818, 7
        %v820 = vsub.s32 %v817, %v819
        %v821 = vrot.slane %v794, %v820
        %v823 = vunpack.c.l.s4 1983009808
        %v824 = vunpack.c.0.s8 %v823
        %v825 = vlaneseq
        %v826 = vshrl.u32 %v825, 7
        %v827 = vsub.s32 %v824, %v826
        %v828 = vrot.slane %v814, %v827
        %v829 = vcombine.high %v802, %v809
        %v831 = vunpack.c.l.s4 1983009808
        %v832 = vunpack.c.0.s8 %v831
        %v833 = vlaneseq
        %v834 = vshrl.u32 %v833, 7
        %v835 = vsub.s32 %v832, %v834
        %v836 = vrot.slane %v802, %v835
        %v838 = vunpack.c.l.s4 1983009808
        %v839 = vunpack.c.0.s8 %v838
        %v840 = vlaneseq
        %v841 = vshrl.u32 %v840, 7
        %v842 = vsub.s32 %v839, %v841
        %v843 = vrot.slane %v829, %v842
        %v844 = vcombine.low %v821, %v836
        %v845 = vcombine.high %v821, %v836
        %v847 = vunpack.c.l.s4 1934713408
        %v848 = vunpack.c.0.s8 %v847
        %v849 = vlaneseq
        %v850 = vshrl.u32 %v849, 7
        %v851 = vsub.s32 %v848, %v850
        %v852 = vrot.slane %v844, %v851
        %v854 = vunpack.c.l.s4 1934713408
        %v855 = vunpack.c.0.s8 %v854
        %v856 = vlaneseq
        %v857 = vshrl.u32 %v856, 7
        %v858 = vsub.s32 %v855, %v857
        %v859 = vrot.slane %v845, %v858
        %v860 = vcombine.low %v828, %v843
        %v861 = vcombine.high %v828, %v843
        %v863 = vunpack.c.l.s4 1934713408
        %v864 = vunpack.c.0.s8 %v863
        %v865 = vlaneseq
        %v866 = vshrl.u32 %v865, 7
        %v867 = vsub.s32 %v864, %v866
        %v868 = vrot.slane %v860, %v867
        %v870 = vunpack.c.l.s4 1934713408
        %v871 = vunpack.c.0.s8 %v870
        %v872 = vlaneseq
        %v873 = vshrl.u32 %v872, 7
        %v874 = vsub.s32 %v871, %v873
        %v875 = vrot.slane %v861, %v874
        %v876 = vcombine.high %v852, 0
        %v877 = vcombine.high %v859, 0
        %v878 = vcombine.high %v868, 0
        %v879 = vcombine.high %v875, 0
        %v880 = vcombine.high %v798, %v812
        %v882 = vunpack.c.l.s4 1983009808
        %v883 = vunpack.c.0.s8 %v882
        %v884 = vlaneseq
        %v885 = vshrl.u32 %v884, 7
        %v886 = vsub.s32 %v883, %v885
        %v887 = vrot.slane %v798, %v886
        %v889 = vunpack.c.l.s4 1983009808
        %v890 = vunpack.c.0.s8 %v889
        %v891 = vlaneseq
        %v892 = vshrl.u32 %v891, 7
        %v893 = vsub.s32 %v890, %v892
        %v894 = vrot.slane %v880, %v893
        %v895 = vcombine.high %v806, %v812
        %v897 = vunpack.c.l.s4 1983009808
        %v898 = vunpack.c.0.s8 %v897
        %v899 = vlaneseq
        %v900 = vshrl.u32 %v899, 7
        %v901 = vsub.s32 %v898, %v900
        %v902 = vrot.slane %v806, %v901
        %v904 = vunpack.c.l.s4 1983009808
        %v905 = vunpack.c.0.s8 %v904
        %v906 = vlaneseq
        %v907 = vshrl.u32 %v906, 7
        %v908 = vsub.s32 %v905, %v907
        %v909 = vrot.slane %v895, %v908
        %v910 = vcombine.low %v887, %v902
        %v911 = vcombine.high %v887, %v902
        %v913 = vunpack.c.l.s4 1934713408
        %v914 = vunpack.c.0.s8 %v913
        %v915 = vlaneseq
        %v916 = vshrl.u32 %v915, 7
        %v917 = vsub.s32 %v914, %v916
        %v918 = vrot.slane %v910, %v917
        %v920 = vunpack.c.l.s4 1934713408
        %v921 = vunpack.c.0.s8 %v920
        %v922 = vlaneseq
        %v923 = vshrl.u32 %v922, 7
        %v924 = vsub.s32 %v921, %v923
        %v925 = vrot.slane %v911, %v924
        %v926 = vcombine.low %v894, %v909
        %v927 = vcombine.high %v894, %v909
        %v929 = vunpack.c.l.s4 1934713408
        %v930 = vunpack.c.0.s8 %v929
        %v931 = vlaneseq
        %v932 = vshrl.u32 %v931, 7
        %v933 = vsub.s32 %v930, %v932
        %v934 = vrot.slane %v926, %v933
        %v936 = vunpack.c.l.s4 1934713408
        %v937 = vunpack.c.0.s8 %v936
        %v938 = vlaneseq
        %v939 = vshrl.u32 %v938, 7
        %v940 = vsub.s32 %v937, %v939
        %v941 = vrot.slane %v927, %v940
        %v942 = vcombine.high %v918, 0
        %v943 = vcombine.high %v925, 0
        %v944 = vcombine.high %v934, 0
        %v945 = vcombine.high %v941, 0
        %v946 = vcombine.low %v852, %v859
        %v948 = vunpack.c.l.s4 1983009808
        %v949 = vunpack.c.0.s8 %v948
        %v950 = vlaneseq
        %v951 = vshrl.u32 %v950, 7
        %v952 = vsub.s32 %v949, %v951
        %v953 = vrot.slane %v946, %v952
        %v954 = vcombine.low %v876, %v877
        %v956 = vunpack.c.l.s4 1983009808
        %v957 = vunpack.c.0.s8 %v956
        %v958 = vlaneseq
        %v959 = vshrl.u32 %v958, 7
        %v960 = vsub.s32 %v957, %v959
        %v961 = vrot.slane %v954, %v960
        %v962 = vcombine.low %v868, %v875
        %v964 = vunpack.c.l.s4 1983009808
        %v965 = vunpack.c.0.s8 %v964
        %v966 = vlaneseq
        %v967 = vshrl.u32 %v966, 7
        %v968 = vsub.s32 %v965, %v967
        %v969 = vrot.slane %v962, %v968
        %v970 = vcombine.low %v878, %v879
        %v972 = vunpack.c.l.s4 1983009808
        %v973 = vunpack.c.0.s8 %v972
        %v974 = vlaneseq
        %v975 = vshrl.u32 %v974, 7
        %v976 = vsub.s32 %v973, %v975
        %v977 = vrot.slane %v970, %v976
        %v978 = vcombine.low %v953, %v961
        %v980 = vunpack.c.l.s4 1934713408
        %v981 = vunpack.c.0.s8 %v980
        %v982 = vlaneseq
        %v983 = vshrl.u32 %v982, 7
        %v984 = vsub.s32 %v981, %v983
        %v985 = vrot.slane %v978, %v984
        %v986 = vcombine.low %v969, %v977
        %v988 = vunpack.c.l.s4 1934713408
        %v989 = vunpack.c.0.s8 %v988
        %v990 = vlaneseq
        %v991 = vshrl.u32 %v990, 7
        %v992 = vsub.s32 %v989, %v991
        %v993 = vrot.slane %v986, %v992
        %v994 = vcombine.low %v985, %v993
        %v995 = vcombine.high %v985, %v993
        %v996 = vcombine.low %v918, %v925
        %v998 = vunpack.c.l.s4 1983009808
        %v999 = vunpack.c.0.s8 %v998
        %v1000 = vlaneseq
        %v1001 = vshrl.u32 %v1000, 7
        %v1002 = vsub.s32 %v999, %v1001
        %v1003 = vrot.slane %v996, %v1002
        %v1004 = vcombine.low %v942, %v943
        %v1006 = vunpack.c.l.s4 1983009808
        %v1007 = vunpack.c.0.s8 %v1006
        %v1008 = vlaneseq
        %v1009 = vshrl.u32 %v1008, 7
        %v1010 = vsub.s32 %v1007, %v1009
        %v1011 = vrot.slane %v1004, %v1010
        %v1012 = vcombine.low %v934, %v941
        %v1014 = vunpack.c.l.s4 1983009808
        %v1015 = vunpack.c.0.s8 %v1014
        %v1016 = vlaneseq
        %v1017 = vshrl.u32 %v1016, 7
        %v1018 = vsub.s32 %v1015, %v1017
        %v1019 = vrot.slane %v1012, %v1018
        %v1020 = vcombine.low %v944, %v945
        %v1022 = vunpack.c.l.s4 1983009808
        %v1023 = vunpack.c.0.s8 %v1022
        %v1024 = vlaneseq
        %v1025 = vshrl.u32 %v1024, 7
        %v1026 = vsub.s32 %v1023, %v1025
        %v1027 = vrot.slane %v1020, %v1026
        %v1028 = vcombine.low %v1003, %v1011
        %v1030 = vunpack.c.l.s4 1934713408
        %v1031 = vunpack.c.0.s8 %v1030
        %v1032 = vlaneseq
        %v1033 = vshrl.u32 %v1032, 7
        %v1034 = vsub.s32 %v1031, %v1033
        %v1035 = vrot.slane %v1028, %v1034
        %v1036 = vcombine.low %v1019, %v1027
        %v1038 = vunpack.c.l.s4 1934713408
        %v1039 = vunpack.c.0.s8 %v1038
        %v1040 = vlaneseq
        %v1041 = vshrl.u32 %v1040, 7
        %v1042 = vsub.s32 %v1039, %v1041
        %v1043 = vrot.slane %v1036, %v1042
        %v1044 = vcombine.low %v1035, %v1043
        %v1045 = vcombine.high %v1035, %v1043
        %v1048 = vpack.i.b16 %v1044, %v994
        %v1049 = vshrl.u32 %v994, 16
        %v1050 = vshrl.u32 %v1044, 16
        %v1051 = vpack.i.b16 %v1050, %v1049
        %v1054 = vpack.i.b16 %v1045, %v995
        %v1055 = vshrl.u32 %v995, 16
        %v1056 = vshrl.u32 %v1045, 16
        %v1057 = vpack.i.b16 %v1056, %v1055
        %1059 = vrot.lane.b32.xlu0 %v783, 96
        %v1060 = vpop.permute.xlu0 %1059
        %1061 = vrot.lane.b32.xlu0 %v783, 64
        %v1062 = vpop.permute.xlu0 %1061
        %1063 = vrot.lane.b32.xlu0 %v783, 32
        %v1064 = vpop.permute.xlu0 %1063
        %v1067 = vpack.i.b16 %v1060, %v783
        %v1069 = vshrl.u32 %v783, 16
        %v1070 = vshrl.u32 %v1060, 16
        %v1071 = vpack.i.b16 %v1070, %v1069
        %v1075 = vpack.i.b16 %v1064, %v1062
        %v1077 = vshrl.u32 %v1062, 16
        %v1078 = vshrl.u32 %v1064, 16
        %v1079 = vpack.i.b16 %v1078, %v1077
        %v1081 = vcombine.high %v1067, %v809
        %v1083 = vunpack.c.l.s4 1983009808
        %v1084 = vunpack.c.0.s8 %v1083
        %v1085 = vlaneseq
        %v1086 = vshrl.u32 %v1085, 7
        %v1087 = vsub.s32 %v1084, %v1086
        %v1088 = vrot.slane %v1067, %v1087
        %v1090 = vunpack.c.l.s4 1983009808
        %v1091 = vunpack.c.0.s8 %v1090
        %v1092 = vlaneseq
        %v1093 = vshrl.u32 %v1092, 7
        %v1094 = vsub.s32 %v1091, %v1093
        %v1095 = vrot.slane %v1081, %v1094
        %v1096 = vcombine.high %v1075, %v809
        %v1098 = vunpack.c.l.s4 1983009808
        %v1099 = vunpack.c.0.s8 %v1098
        %v1100 = vlaneseq
        %v1101 = vshrl.u32 %v1100, 7
        %v1102 = vsub.s32 %v1099, %v1101
        %v1103 = vrot.slane %v1075, %v1102
        %v1105 = vunpack.c.l.s4 1983009808
        %v1106 = vunpack.c.0.s8 %v1105
        %v1107 = vlaneseq
        %v1108 = vshrl.u32 %v1107, 7
        %v1109 = vsub.s32 %v1106, %v1108
        %v1110 = vrot.slane %v1096, %v1109
        %v1111 = vcombine.low %v1088, %v1103
        %v1112 = vcombine.high %v1088, %v1103
        %v1114 = vunpack.c.l.s4 1934713408
        %v1115 = vunpack.c.0.s8 %v1114
        %v1116 = vlaneseq
        %v1117 = vshrl.u32 %v1116, 7
        %v1118 = vsub.s32 %v1115, %v1117
        %v1119 = vrot.slane %v1111, %v1118
        %v1121 = vunpack.c.l.s4 1934713408
        %v1122 = vunpack.c.0.s8 %v1121
        %v1123 = vlaneseq
        %v1124 = vshrl.u32 %v1123, 7
        %v1125 = vsub.s32 %v1122, %v1124
        %v1126 = vrot.slane %v1112, %v1125
        %v1127 = vcombine.low %v1095, %v1110
        %v1128 = vcombine.high %v1095, %v1110
        %v1130 = vunpack.c.l.s4 1934713408
        %v1131 = vunpack.c.0.s8 %v1130
        %v1132 = vlaneseq
        %v1133 = vshrl.u32 %v1132, 7
        %v1134 = vsub.s32 %v1131, %v1133
        %v1135 = vrot.slane %v1127, %v1134
        %v1137 = vunpack.c.l.s4 1934713408
        %v1138 = vunpack.c.0.s8 %v1137
        %v1139 = vlaneseq
        %v1140 = vshrl.u32 %v1139, 7
        %v1141 = vsub.s32 %v1138, %v1140
        %v1142 = vrot.slane %v1128, %v1141
        %v1143 = vcombine.high %v1119, 0
        %v1144 = vcombine.high %v1126, 0
        %v1145 = vcombine.high %v1135, 0
        %v1146 = vcombine.high %v1142, 0
        %v1147 = vcombine.high %v1071, %v812
        %v1149 = vunpack.c.l.s4 1983009808
        %v1150 = vunpack.c.0.s8 %v1149
        %v1151 = vlaneseq
        %v1152 = vshrl.u32 %v1151, 7
        %v1153 = vsub.s32 %v1150, %v1152
        %v1154 = vrot.slane %v1071, %v1153
        %v1156 = vunpack.c.l.s4 1983009808
        %v1157 = vunpack.c.0.s8 %v1156
        %v1158 = vlaneseq
        %v1159 = vshrl.u32 %v1158, 7
        %v1160 = vsub.s32 %v1157, %v1159
        %v1161 = vrot.slane %v1147, %v1160
        %v1162 = vcombine.high %v1079, %v812
        %v1164 = vunpack.c.l.s4 1983009808
        %v1165 = vunpack.c.0.s8 %v1164
        %v1166 = vlaneseq
        %v1167 = vshrl.u32 %v1166, 7
        %v1168 = vsub.s32 %v1165, %v1167
        %v1169 = vrot.slane %v1079, %v1168
        %v1171 = vunpack.c.l.s4 1983009808
        %v1172 = vunpack.c.0.s8 %v1171
        %v1173 = vlaneseq
        %v1174 = vshrl.u32 %v1173, 7
        %v1175 = vsub.s32 %v1172, %v1174
        %v1176 = vrot.slane %v1162, %v1175
        %v1177 = vcombine.low %v1154, %v1169
        %v1178 = vcombine.high %v1154, %v1169
        %v1180 = vunpack.c.l.s4 1934713408
        %v1181 = vunpack.c.0.s8 %v1180
        %v1182 = vlaneseq
        %v1183 = vshrl.u32 %v1182, 7
        %v1184 = vsub.s32 %v1181, %v1183
        %v1185 = vrot.slane %v1177, %v1184
        %v1187 = vunpack.c.l.s4 1934713408
        %v1188 = vunpack.c.0.s8 %v1187
        %v1189 = vlaneseq
        %v1190 = vshrl.u32 %v1189, 7
        %v1191 = vsub.s32 %v1188, %v1190
        %v1192 = vrot.slane %v1178, %v1191
        %v1193 = vcombine.low %v1161, %v1176
        %v1194 = vcombine.high %v1161, %v1176
        %v1196 = vunpack.c.l.s4 1934713408
        %v1197 = vunpack.c.0.s8 %v1196
        %v1198 = vlaneseq
        %v1199 = vshrl.u32 %v1198, 7
        %v1200 = vsub.s32 %v1197, %v1199
        %v1201 = vrot.slane %v1193, %v1200
        %v1203 = vunpack.c.l.s4 1934713408
        %v1204 = vunpack.c.0.s8 %v1203
        %v1205 = vlaneseq
        %v1206 = vshrl.u32 %v1205, 7
        %v1207 = vsub.s32 %v1204, %v1206
        %v1208 = vrot.slane %v1194, %v1207
        %v1209 = vcombine.high %v1185, 0
        %v1210 = vcombine.high %v1192, 0
        %v1211 = vcombine.high %v1201, 0
        %v1212 = vcombine.high %v1208, 0
        %v1213 = vcombine.low %v1119, %v1126
        %v1215 = vunpack.c.l.s4 1983009808
        %v1216 = vunpack.c.0.s8 %v1215
        %v1217 = vlaneseq
        %v1218 = vshrl.u32 %v1217, 7
        %v1219 = vsub.s32 %v1216, %v1218
        %v1220 = vrot.slane %v1213, %v1219
        %v1221 = vcombine.low %v1143, %v1144
        %v1223 = vunpack.c.l.s4 1983009808
        %v1224 = vunpack.c.0.s8 %v1223
        %v1225 = vlaneseq
        %v1226 = vshrl.u32 %v1225, 7
        %v1227 = vsub.s32 %v1224, %v1226
        %v1228 = vrot.slane %v1221, %v1227
        %v1229 = vcombine.low %v1135, %v1142
        %v1231 = vunpack.c.l.s4 1983009808
        %v1232 = vunpack.c.0.s8 %v1231
        %v1233 = vlaneseq
        %v1234 = vshrl.u32 %v1233, 7
        %v1235 = vsub.s32 %v1232, %v1234
        %v1236 = vrot.slane %v1229, %v1235
        %v1237 = vcombine.low %v1145, %v1146
        %v1239 = vunpack.c.l.s4 1983009808
        %v1240 = vunpack.c.0.s8 %v1239
        %v1241 = vlaneseq
        %v1242 = vshrl.u32 %v1241, 7
        %v1243 = vsub.s32 %v1240, %v1242
        %v1244 = vrot.slane %v1237, %v1243
        %v1245 = vcombine.low %v1220, %v1228
        %v1247 = vunpack.c.l.s4 1934713408
        %v1248 = vunpack.c.0.s8 %v1247
        %v1249 = vlaneseq
        %v1250 = vshrl.u32 %v1249, 7
        %v1251 = vsub.s32 %v1248, %v1250
        %v1252 = vrot.slane %v1245, %v1251
        %v1253 = vcombine.low %v1236, %v1244
        %v1255 = vunpack.c.l.s4 1934713408
        %v1256 = vunpack.c.0.s8 %v1255
        %v1257 = vlaneseq
        %v1258 = vshrl.u32 %v1257, 7
        %v1259 = vsub.s32 %v1256, %v1258
        %v1260 = vrot.slane %v1253, %v1259
        %v1261 = vcombine.low %v1252, %v1260
        %v1262 = vcombine.high %v1252, %v1260
        %v1263 = vcombine.low %v1185, %v1192
        %v1265 = vunpack.c.l.s4 1983009808
        %v1266 = vunpack.c.0.s8 %v1265
        %v1267 = vlaneseq
        %v1268 = vshrl.u32 %v1267, 7
        %v1269 = vsub.s32 %v1266, %v1268
        %v1270 = vrot.slane %v1263, %v1269
        %v1271 = vcombine.low %v1209, %v1210
        %v1273 = vunpack.c.l.s4 1983009808
        %v1274 = vunpack.c.0.s8 %v1273
        %v1275 = vlaneseq
        %v1276 = vshrl.u32 %v1275, 7
        %v1277 = vsub.s32 %v1274, %v1276
        %v1278 = vrot.slane %v1271, %v1277
        %v1279 = vcombine.low %v1201, %v1208
        %v1281 = vunpack.c.l.s4 1983009808
        %v1282 = vunpack.c.0.s8 %v1281
        %v1283 = vlaneseq
        %v1284 = vshrl.u32 %v1283, 7
        %v1285 = vsub.s32 %v1282, %v1284
        %v1286 = vrot.slane %v1279, %v1285
        %v1287 = vcombine.low %v1211, %v1212
        %v1289 = vunpack.c.l.s4 1983009808
        %v1290 = vunpack.c.0.s8 %v1289
        %v1291 = vlaneseq
        %v1292 = vshrl.u32 %v1291, 7
        %v1293 = vsub.s32 %v1290, %v1292
        %v1294 = vrot.slane %v1287, %v1293
        %v1295 = vcombine.low %v1270, %v1278
        %v1297 = vunpack.c.l.s4 1934713408
        %v1298 = vunpack.c.0.s8 %v1297
        %v1299 = vlaneseq
        %v1300 = vshrl.u32 %v1299, 7
        %v1301 = vsub.s32 %v1298, %v1300
        %v1302 = vrot.slane %v1295, %v1301
        %v1303 = vcombine.low %v1286, %v1294
        %v1305 = vunpack.c.l.s4 1934713408
        %v1306 = vunpack.c.0.s8 %v1305
        %v1307 = vlaneseq
        %v1308 = vshrl.u32 %v1307, 7
        %v1309 = vsub.s32 %v1306, %v1308
        %v1310 = vrot.slane %v1303, %v1309
        %v1311 = vcombine.low %v1302, %v1310
        %v1312 = vcombine.high %v1302, %v1310
        %v1315 = vpack.i.b16 %v1311, %v1261
        %v1316 = vshrl.u32 %v1261, 16
        %v1317 = vshrl.u32 %v1311, 16
        %v1318 = vpack.i.b16 %v1317, %v1316
        %v1321 = vpack.i.b16 %v1312, %v1262
        %v1322 = vshrl.u32 %v1262, 16
        %v1323 = vshrl.u32 %v1312, 16
        %v1324 = vpack.i.b16 %v1323, %v1322
        %1326 = vrot.lane.b32.xlu0 %v784, 96
        %v1327 = vpop.permute.xlu0 %1326
        %1328 = vrot.lane.b32.xlu0 %v784, 64
        %v1329 = vpop.permute.xlu0 %1328
        %1330 = vrot.lane.b32.xlu0 %v784, 32
        %v1331 = vpop.permute.xlu0 %1330
        %v1334 = vpack.i.b16 %v1327, %v784
        %v1336 = vshrl.u32 %v784, 16
        %v1337 = vshrl.u32 %v1327, 16
        %v1338 = vpack.i.b16 %v1337, %v1336
        %v1342 = vpack.i.b16 %v1331, %v1329
        %v1344 = vshrl.u32 %v1329, 16
        %v1345 = vshrl.u32 %v1331, 16
        %v1346 = vpack.i.b16 %v1345, %v1344
        %v1348 = vcombine.high %v1334, %v809
        %v1350 = vunpack.c.l.s4 1983009808
        %v1351 = vunpack.c.0.s8 %v1350
        %v1352 = vlaneseq
        %v1353 = vshrl.u32 %v1352, 7
        %v1354 = vsub.s32 %v1351, %v1353
        %v1355 = vrot.slane %v1334, %v1354
        %v1357 = vunpack.c.l.s4 1983009808
        %v1358 = vunpack.c.0.s8 %v1357
        %v1359 = vlaneseq
        %v1360 = vshrl.u32 %v1359, 7
        %v1361 = vsub.s32 %v1358, %v1360
        %v1362 = vrot.slane %v1348, %v1361
        %v1363 = vcombine.high %v1342, %v809
        %v1365 = vunpack.c.l.s4 1983009808
        %v1366 = vunpack.c.0.s8 %v1365
        %v1367 = vlaneseq
        %v1368 = vshrl.u32 %v1367, 7
        %v1369 = vsub.s32 %v1366, %v1368
        %v1370 = vrot.slane %v1342, %v1369
        %v1372 = vunpack.c.l.s4 1983009808
        %v1373 = vunpack.c.0.s8 %v1372
        %v1374 = vlaneseq
        %v1375 = vshrl.u32 %v1374, 7
        %v1376 = vsub.s32 %v1373, %v1375
        %v1377 = vrot.slane %v1363, %v1376
        %v1378 = vcombine.low %v1355, %v1370
        %v1379 = vcombine.high %v1355, %v1370
        %v1381 = vunpack.c.l.s4 1934713408
        %v1382 = vunpack.c.0.s8 %v1381
        %v1383 = vlaneseq
        %v1384 = vshrl.u32 %v1383, 7
        %v1385 = vsub.s32 %v1382, %v1384
        %v1386 = vrot.slane %v1378, %v1385
        %v1388 = vunpack.c.l.s4 1934713408
        %v1389 = vunpack.c.0.s8 %v1388
        %v1390 = vlaneseq
        %v1391 = vshrl.u32 %v1390, 7
        %v1392 = vsub.s32 %v1389, %v1391
        %v1393 = vrot.slane %v1379, %v1392
        %v1394 = vcombine.low %v1362, %v1377
        %v1395 = vcombine.high %v1362, %v1377
        %v1397 = vunpack.c.l.s4 1934713408
        %v1398 = vunpack.c.0.s8 %v1397
        %v1399 = vlaneseq
        %v1400 = vshrl.u32 %v1399, 7
        %v1401 = vsub.s32 %v1398, %v1400
        %v1402 = vrot.slane %v1394, %v1401
        %v1404 = vunpack.c.l.s4 1934713408
        %v1405 = vunpack.c.0.s8 %v1404
        %v1406 = vlaneseq
        %v1407 = vshrl.u32 %v1406, 7
        %v1408 = vsub.s32 %v1405, %v1407
        %v1409 = vrot.slane %v1395, %v1408
        %v1410 = vcombine.high %v1386, 0
        %v1411 = vcombine.high %v1393, 0
        %v1412 = vcombine.high %v1402, 0
        %v1413 = vcombine.high %v1409, 0
        %v1414 = vcombine.high %v1338, %v812
        %v1416 = vunpack.c.l.s4 1983009808
        %v1417 = vunpack.c.0.s8 %v1416
        %v1418 = vlaneseq
        %v1419 = vshrl.u32 %v1418, 7
        %v1420 = vsub.s32 %v1417, %v1419
        %v1421 = vrot.slane %v1338, %v1420
        %v1423 = vunpack.c.l.s4 1983009808
        %v1424 = vunpack.c.0.s8 %v1423
        %v1425 = vlaneseq
        %v1426 = vshrl.u32 %v1425, 7
        %v1427 = vsub.s32 %v1424, %v1426
        %v1428 = vrot.slane %v1414, %v1427
        %v1429 = vcombine.high %v1346, %v812
        %v1431 = vunpack.c.l.s4 1983009808
        %v1432 = vunpack.c.0.s8 %v1431
        %v1433 = vlaneseq
        %v1434 = vshrl.u32 %v1433, 7
        %v1435 = vsub.s32 %v1432, %v1434
        %v1436 = vrot.slane %v1346, %v1435
        %v1438 = vunpack.c.l.s4 1983009808
        %v1439 = vunpack.c.0.s8 %v1438
        %v1440 = vlaneseq
        %v1441 = vshrl.u32 %v1440, 7
        %v1442 = vsub.s32 %v1439, %v1441
        %v1443 = vrot.slane %v1429, %v1442
        %v1444 = vcombine.low %v1421, %v1436
        %v1445 = vcombine.high %v1421, %v1436
        %v1447 = vunpack.c.l.s4 1934713408
        %v1448 = vunpack.c.0.s8 %v1447
        %v1449 = vlaneseq
        %v1450 = vshrl.u32 %v1449, 7
        %v1451 = vsub.s32 %v1448, %v1450
        %v1452 = vrot.slane %v1444, %v1451
        %v1454 = vunpack.c.l.s4 1934713408
        %v1455 = vunpack.c.0.s8 %v1454
        %v1456 = vlaneseq
        %v1457 = vshrl.u32 %v1456, 7
        %v1458 = vsub.s32 %v1455, %v1457
        %v1459 = vrot.slane %v1445, %v1458
        %v1460 = vcombine.low %v1428, %v1443
        %v1461 = vcombine.high %v1428, %v1443
        %v1463 = vunpack.c.l.s4 1934713408
        %v1464 = vunpack.c.0.s8 %v1463
        %v1465 = vlaneseq
        %v1466 = vshrl.u32 %v1465, 7
        %v1467 = vsub.s32 %v1464, %v1466
        %v1468 = vrot.slane %v1460, %v1467
        %v1470 = vunpack.c.l.s4 1934713408
        %v1471 = vunpack.c.0.s8 %v1470
        %v1472 = vlaneseq
        %v1473 = vshrl.u32 %v1472, 7
        %v1474 = vsub.s32 %v1471, %v1473
        %v1475 = vrot.slane %v1461, %v1474
        %v1476 = vcombine.high %v1452, 0
        %v1477 = vcombine.high %v1459, 0
        %v1478 = vcombine.high %v1468, 0
        %v1479 = vcombine.high %v1475, 0
        %v1480 = vcombine.low %v1386, %v1393
        %v1482 = vunpack.c.l.s4 1983009808
        %v1483 = vunpack.c.0.s8 %v1482
        %v1484 = vlaneseq
        %v1485 = vshrl.u32 %v1484, 7
        %v1486 = vsub.s32 %v1483, %v1485
        %v1487 = vrot.slane %v1480, %v1486
        %v1488 = vcombine.low %v1410, %v1411
        %v1490 = vunpack.c.l.s4 1983009808
        %v1491 = vunpack.c.0.s8 %v1490
        %v1492 = vlaneseq
        %v1493 = vshrl.u32 %v1492, 7
        %v1494 = vsub.s32 %v1491, %v1493
        %v1495 = vrot.slane %v1488, %v1494
        %v1496 = vcombine.low %v1402, %v1409
        %v1498 = vunpack.c.l.s4 1983009808
        %v1499 = vunpack.c.0.s8 %v1498
        %v1500 = vlaneseq
        %v1501 = vshrl.u32 %v1500, 7
        %v1502 = vsub.s32 %v1499, %v1501
        %v1503 = vrot.slane %v1496, %v1502
        %v1504 = vcombine.low %v1412, %v1413
        %v1506 = vunpack.c.l.s4 1983009808
        %v1507 = vunpack.c.0.s8 %v1506
        %v1508 = vlaneseq
        %v1509 = vshrl.u32 %v1508, 7
        %v1510 = vsub.s32 %v1507, %v1509
        %v1511 = vrot.slane %v1504, %v1510
        %v1512 = vcombine.low %v1487, %v1495
        %v1514 = vunpack.c.l.s4 1934713408
        %v1515 = vunpack.c.0.s8 %v1514
        %v1516 = vlaneseq
        %v1517 = vshrl.u32 %v1516, 7
        %v1518 = vsub.s32 %v1515, %v1517
        %v1519 = vrot.slane %v1512, %v1518
        %v1520 = vcombine.low %v1503, %v1511
        %v1522 = vunpack.c.l.s4 1934713408
        %v1523 = vunpack.c.0.s8 %v1522
        %v1524 = vlaneseq
        %v1525 = vshrl.u32 %v1524, 7
        %v1526 = vsub.s32 %v1523, %v1525
        %v1527 = vrot.slane %v1520, %v1526
        %v1528 = vcombine.low %v1519, %v1527
        %v1529 = vcombine.high %v1519, %v1527
        %v1530 = vcombine.low %v1452, %v1459
        %v1532 = vunpack.c.l.s4 1983009808
        %v1533 = vunpack.c.0.s8 %v1532
        %v1534 = vlaneseq
        %v1535 = vshrl.u32 %v1534, 7
        %v1536 = vsub.s32 %v1533, %v1535
        %v1537 = vrot.slane %v1530, %v1536
        %v1538 = vcombine.low %v1476, %v1477
        %v1540 = vunpack.c.l.s4 1983009808
        %v1541 = vunpack.c.0.s8 %v1540
        %v1542 = vlaneseq
        %v1543 = vshrl.u32 %v1542, 7
        %v1544 = vsub.s32 %v1541, %v1543
        %v1545 = vrot.slane %v1538, %v1544
        %v1546 = vcombine.low %v1468, %v1475
        %v1548 = vunpack.c.l.s4 1983009808
        %v1549 = vunpack.c.0.s8 %v1548
        %v1550 = vlaneseq
        %v1551 = vshrl.u32 %v1550, 7
        %v1552 = vsub.s32 %v1549, %v1551
        %v1553 = vrot.slane %v1546, %v1552
        %v1554 = vcombine.low %v1478, %v1479
        %v1556 = vunpack.c.l.s4 1983009808
        %v1557 = vunpack.c.0.s8 %v1556
        %v1558 = vlaneseq
        %v1559 = vshrl.u32 %v1558, 7
        %v1560 = vsub.s32 %v1557, %v1559
        %v1561 = vrot.slane %v1554, %v1560
        %v1562 = vcombine.low %v1537, %v1545
        %v1564 = vunpack.c.l.s4 1934713408
        %v1565 = vunpack.c.0.s8 %v1564
        %v1566 = vlaneseq
        %v1567 = vshrl.u32 %v1566, 7
        %v1568 = vsub.s32 %v1565, %v1567
        %v1569 = vrot.slane %v1562, %v1568
        %v1570 = vcombine.low %v1553, %v1561
        %v1572 = vunpack.c.l.s4 1934713408
        %v1573 = vunpack.c.0.s8 %v1572
        %v1574 = vlaneseq
        %v1575 = vshrl.u32 %v1574, 7
        %v1576 = vsub.s32 %v1573, %v1575
        %v1577 = vrot.slane %v1570, %v1576
        %v1578 = vcombine.low %v1569, %v1577
        %v1579 = vcombine.high %v1569, %v1577
        %v1582 = vpack.i.b16 %v1578, %v1528
        %v1584 = vshrl.u32 %v1528, 16
        %v1585 = vshrl.u32 %v1578, 16
        %v1586 = vpack.i.b16 %v1585, %v1584
        %v1590 = vpack.i.b16 %v1579, %v1529
        %v1592 = vshrl.u32 %v1529, 16
        %v1593 = vshrl.u32 %v1579, 16
        %v1594 = vpack.i.b16 %v1593, %v1592
        %vm1596 = vcmask 261120
        %v1598 = vsel %vm1596, %v1048, 0
        %v1601 = vsel %vm1596, %v1315, 0
        %1603 = vmatprep.subr.bf16.mxu0 0
        %1604 = vmatpush1.bf16.xpose.msra.mxu0 %v1601
        %1605 = vmatprep.subr.bf16.mxu0 0
        %1606 = vmatpush1.bf16.xpose.msra.mxu0 0
        %1607 = vmatprep.subr.bf16.mxu0 0
        %1608 = vmatpush1.bf16.xpose.msra.mxu0 0
        %1609 = vmatprep.subr.bf16.mxu0 0
        %1610 = vmatpush1.bf16.xpose.msra.mxu0 0
        %1611 = vmatprep.subr.bf16.mxu0 0
        %1612 = vmatpush1.bf16.xpose.msra.mxu0 0
        %1613 = vmatprep.subr.bf16.mxu0 0
        %1614 = vmatpush1.bf16.xpose.msra.mxu0 0
        %1615 = vmatprep.subr.bf16.mxu0 0
        %1616 = vmatpush1.bf16.xpose.msra.mxu0 0
        %1617 = vmatprep.subr.bf16.mxu0 0
        %1618 = vmatpush1.bf16.xpose.msra.mxu0 0
        %1619 = vmatprep.subr.bf16.mxu0 0
        %1620 = vmatpush1.bf16.xpose.msra.mxu0 0
        %1621 = vmatprep.subr.bf16.mxu0 0
        %1622 = vmatpush1.bf16.xpose.msra.mxu0 0
        %1623 = vmatprep.subr.bf16.mxu0 0
        %1624 = vmatpush1.bf16.xpose.msra.mxu0 0
        %1625 = vmatprep.subr.bf16.mxu0 0
        %1626 = vmatpush1.bf16.xpose.msra.mxu0 0
        %1627 = vmatprep.subr.bf16.mxu0 0
        %1628 = vmatpush1.bf16.xpose.msra.mxu0 0
        %1629 = vmatprep.subr.bf16.mxu0 0
        %1630 = vmatpush1.bf16.xpose.msra.mxu0 0
        %1631 = vmatprep.subr.bf16.mxu0 0
        %1632 = vmatpush1.bf16.xpose.msra.mxu0 0
        %1633 = vmatprep.subr.bf16.mxu0 0
        %1634 = vmatpush1.bf16.xpose.msra.mxu0 0
        %1635 = vmatprep.mubr.bf16.mxu0 0
        %1636 = vmatmul.mubr.bf16.gmra.mrb[0].mxu0 %v1598
        %v1637 = vpop.f32.mrb[0].mxu0
        %v1638 = vadd.f32 0.0, %v1637
        %v1639 = vpop.f32.mrb[0].mxu0
        %v1640 = vpop.f32.mrb[0].mxu0
        %v1641 = vadd.f32 0.0, %v1640
        %v1642 = vpop.f32.mrb[0].mxu0
        %1643 = vdwg.mxu0
        %v1645 = vsel %vm1596, %v1051, 0
        %v1648 = vsel %vm1596, %v1318, 0
        %1650 = vmatprep.subr.bf16.mxu0 0
        %1651 = vmatpush1.bf16.xpose.msra.mxu0 %v1648
        %1652 = vmatprep.subr.bf16.mxu0 0
        %1653 = vmatpush1.bf16.xpose.msra.mxu0 0
        %1654 = vmatprep.subr.bf16.mxu0 0
        %1655 = vmatpush1.bf16.xpose.msra.mxu0 0
        %1656 = vmatprep.subr.bf16.mxu0 0
        %1657 = vmatpush1.bf16.xpose.msra.mxu0 0
        %1658 = vmatprep.subr.bf16.mxu0 0
        %1659 = vmatpush1.bf16.xpose.msra.mxu0 0
        %1660 = vmatprep.subr.bf16.mxu0 0
        %1661 = vmatpush1.bf16.xpose.msra.mxu0 0
        %1662 = vmatprep.subr.bf16.mxu0 0
        %1663 = vmatpush1.bf16.xpose.msra.mxu0 0
        %1664 = vmatprep.subr.bf16.mxu0 0
        %1665 = vmatpush1.bf16.xpose.msra.mxu0 0
        %1666 = vmatprep.subr.bf16.mxu0 0
        %1667 = vmatpush1.bf16.xpose.msra.mxu0 0
        %1668 = vmatprep.subr.bf16.mxu0 0
        %1669 = vmatpush1.bf16.xpose.msra.mxu0 0
        %1670 = vmatprep.subr.bf16.mxu0 0
        %1671 = vmatpush1.bf16.xpose.msra.mxu0 0
        %1672 = vmatprep.subr.bf16.mxu0 0
        %1673 = vmatpush1.bf16.xpose.msra.mxu0 0
        %1674 = vmatprep.subr.bf16.mxu0 0
        %1675 = vmatpush1.bf16.xpose.msra.mxu0 0
        %1676 = vmatprep.subr.bf16.mxu0 0
        %1677 = vmatpush1.bf16.xpose.msra.mxu0 0
        %1678 = vmatprep.subr.bf16.mxu0 0
        %1679 = vmatpush1.bf16.xpose.msra.mxu0 0
        %1680 = vmatprep.subr.bf16.mxu0 0
        %1681 = vmatpush1.bf16.xpose.msra.mxu0 0
        %1682 = vmatprep.mubr.bf16.mxu0 0
        %1683 = vmatmul.mubr.bf16.gmra.mrb[0].mxu0 %v1645
        %v1684 = vpop.f32.mrb[0].mxu0
        %v1685 = vadd.f32 0.0, %v1684
        %v1686 = vpop.f32.mrb[0].mxu0
        %v1687 = vpop.f32.mrb[0].mxu0
        %v1688 = vadd.f32 0.0, %v1687
        %v1689 = vpop.f32.mrb[0].mxu0
        %1690 = vdwg.mxu0
        %v1692 = vsel %vm1596, %v1054, 0
        %v1695 = vsel %vm1596, %v1321, 0
        %1697 = vmatprep.subr.bf16.mxu0 0
        %1698 = vmatpush1.bf16.xpose.msra.mxu0 %v1695
        %1699 = vmatprep.subr.bf16.mxu0 0
        %1700 = vmatpush1.bf16.xpose.msra.mxu0 0
        %1701 = vmatprep.subr.bf16.mxu0 0
        %1702 = vmatpush1.bf16.xpose.msra.mxu0 0
        %1703 = vmatprep.subr.bf16.mxu0 0
        %1704 = vmatpush1.bf16.xpose.msra.mxu0 0
        %1705 = vmatprep.subr.bf16.mxu0 0
        %1706 = vmatpush1.bf16.xpose.msra.mxu0 0
        %1707 = vmatprep.subr.bf16.mxu0 0
        %1708 = vmatpush1.bf16.xpose.msra.mxu0 0
        %1709 = vmatprep.subr.bf16.mxu0 0
        %1710 = vmatpush1.bf16.xpose.msra.mxu0 0
        %1711 = vmatprep.subr.bf16.mxu0 0
        %1712 = vmatpush1.bf16.xpose.msra.mxu0 0
        %1713 = vmatprep.subr.bf16.mxu0 0
        %1714 = vmatpush1.bf16.xpose.msra.mxu0 0
        %1715 = vmatprep.subr.bf16.mxu0 0
        %1716 = vmatpush1.bf16.xpose.msra.mxu0 0
        %1717 = vmatprep.subr.bf16.mxu0 0
        %1718 = vmatpush1.bf16.xpose.msra.mxu0 0
        %1719 = vmatprep.subr.bf16.mxu0 0
        %1720 = vmatpush1.bf16.xpose.msra.mxu0 0
        %1721 = vmatprep.subr.bf16.mxu0 0
        %1722 = vmatpush1.bf16.xpose.msra.mxu0 0
        %1723 = vmatprep.subr.bf16.mxu0 0
        %1724 = vmatpush1.bf16.xpose.msra.mxu0 0
        %1725 = vmatprep.subr.bf16.mxu0 0
        %1726 = vmatpush1.bf16.xpose.msra.mxu0 0
        %1727 = vmatprep.subr.bf16.mxu0 0
        %1728 = vmatpush1.bf16.xpose.msra.mxu0 0
        %1729 = vmatprep.mubr.bf16.mxu0 0
        %1730 = vmatmul.mubr.bf16.gmra.mrb[0].mxu0 %v1692
        %v1731 = vpop.f32.mrb[0].mxu0
        %v1732 = vadd.f32 0.0, %v1731
        %v1733 = vpop.f32.mrb[0].mxu0
        %v1734 = vpop.f32.mrb[0].mxu0
        %v1735 = vadd.f32 0.0, %v1734
        %v1736 = vpop.f32.mrb[0].mxu0
        %1737 = vdwg.mxu0
        %v1739 = vsel %vm1596, %v1057, 0
        %v1742 = vsel %vm1596, %v1324, 0
        %1744 = vmatprep.subr.bf16.mxu0 0
        %1745 = vmatpush1.bf16.xpose.msra.mxu0 %v1742
        %1746 = vmatprep.subr.bf16.mxu0 0
        %1747 = vmatpush1.bf16.xpose.msra.mxu0 0
        %1748 = vmatprep.subr.bf16.mxu0 0
        %1749 = vmatpush1.bf16.xpose.msra.mxu0 0
        %1750 = vmatprep.subr.bf16.mxu0 0
        %1751 = vmatpush1.bf16.xpose.msra.mxu0 0
        %1752 = vmatprep.subr.bf16.mxu0 0
        %1753 = vmatpush1.bf16.xpose.msra.mxu0 0
        %1754 = vmatprep.subr.bf16.mxu0 0
        %1755 = vmatpush1.bf16.xpose.msra.mxu0 0
        %1756 = vmatprep.subr.bf16.mxu0 0
        %1757 = vmatpush1.bf16.xpose.msra.mxu0 0
        %1758 = vmatprep.subr.bf16.mxu0 0
        %1759 = vmatpush1.bf16.xpose.msra.mxu0 0
        %1760 = vmatprep.subr.bf16.mxu0 0
        %1761 = vmatpush1.bf16.xpose.msra.mxu0 0
        %1762 = vmatprep.subr.bf16.mxu0 0
        %1763 = vmatpush1.bf16.xpose.msra.mxu0 0
        %1764 = vmatprep.subr.bf16.mxu0 0
        %1765 = vmatpush1.bf16.xpose.msra.mxu0 0
        %1766 = vmatprep.subr.bf16.mxu0 0
        %1767 = vmatpush1.bf16.xpose.msra.mxu0 0
        %1768 = vmatprep.subr.bf16.mxu0 0
        %1769 = vmatpush1.bf16.xpose.msra.mxu0 0
        %1770 = vmatprep.subr.bf16.mxu0 0
        %1771 = vmatpush1.bf16.xpose.msra.mxu0 0
        %1772 = vmatprep.subr.bf16.mxu0 0
        %1773 = vmatpush1.bf16.xpose.msra.mxu0 0
        %1774 = vmatprep.subr.bf16.mxu0 0
        %1775 = vmatpush1.bf16.xpose.msra.mxu0 0
        %1776 = vmatprep.mubr.bf16.mxu0 0
        %1777 = vmatmul.mubr.bf16.gmra.mrb[0].mxu0 %v1739
        %v1778 = vpop.f32.mrb[0].mxu0
        %v1779 = vadd.f32 0.0, %v1778
        %v1780 = vpop.f32.mrb[0].mxu0
        %v1781 = vpop.f32.mrb[0].mxu0
        %v1782 = vadd.f32 0.0, %v1781
        %v1783 = vpop.f32.mrb[0].mxu0
        %1784 = vdwg.mxu0
        %vm1785 = vcmask 130048
        %v1786 = vsel %vm1785, %v1638, -inf
        %1787 = vmax.xlane.f32.xlu0 %v1786
        %v1788 = vpop.xlane.xlu0 %1787
        %v1789 = vsel %vm1785, %v1641, -inf
        %1790 = vmax.xlane.f32.xlu0 %v1789
        %v1791 = vpop.xlane.xlu0 %1790
        %v1792 = vsel %vm1785, %v1685, -inf
        %1793 = vmax.xlane.f32.xlu0 %v1792
        %v1794 = vpop.xlane.xlu0 %1793
        %v1795 = vsel %vm1785, %v1688, -inf
        %1796 = vmax.xlane.f32.xlu0 %v1795
        %v1797 = vpop.xlane.xlu0 %1796
        %v1798 = vsel %vm1785, %v1732, -inf
        %1799 = vmax.xlane.f32.xlu0 %v1798
        %v1800 = vpop.xlane.xlu0 %1799
        %v1801 = vsel %vm1785, %v1735, -inf
        %1802 = vmax.xlane.f32.xlu0 %v1801
        %v1803 = vpop.xlane.xlu0 %1802
        %v1804 = vsel %vm1785, %v1779, -inf
        %1805 = vmax.xlane.f32.xlu0 %v1804
        %v1806 = vpop.xlane.xlu0 %1805
        %v1807 = vsel %vm1785, %v1782, -inf
        %1808 = vmax.xlane.f32.xlu0 %v1807
        %v1809 = vpop.xlane.xlu0 %1808
        %v1810 = vsub.f32 %v1638, %v1788
        %v1811 = vsub.f32 %v1641, %v1791
        %v1812 = vsub.f32 %v1685, %v1794
        %v1813 = vsub.f32 %v1688, %v1797
        %v1814 = vsub.f32 %v1732, %v1800
        %v1815 = vsub.f32 %v1735, %v1803
        %v1816 = vsub.f32 %v1779, %v1806
        %v1817 = vsub.f32 %v1782, %v1809
        %v1818 = vmul.f32 %v1810, 1.442695
        %v1819 = vpow.pop %v1818
        %v1820 = vmul.f32 %v1811, 1.442695
        %v1821 = vpow.pop %v1820
        %v1822 = vmul.f32 %v1812, 1.442695
        %v1823 = vpow.pop %v1822
        %v1824 = vmul.f32 %v1813, 1.442695
        %v1825 = vpow.pop %v1824
        %v1826 = vmul.f32 %v1814, 1.442695
        %v1827 = vpow.pop %v1826
        %v1828 = vmul.f32 %v1815, 1.442695
        %v1829 = vpow.pop %v1828
        %v1830 = vmul.f32 %v1816, 1.442695
        %v1831 = vpow.pop %v1830
        %v1832 = vmul.f32 %v1817, 1.442695
        %v1833 = vpow.pop %v1832
        %v1834 = vsel %vm1785, %v1819, 0.0
        %1835 = vadd.xlane.f32.xlu0 %v1834
        %v1836 = vpop.xlane.xlu0 %1835
        %v1837 = vsel %vm1785, %v1821, 0.0
        %1838 = vadd.xlane.f32.xlu0 %v1837
        %v1839 = vpop.xlane.xlu0 %1838
        %v1840 = vsel %vm1785, %v1823, 0.0
        %1841 = vadd.xlane.f32.xlu0 %v1840
        %v1842 = vpop.xlane.xlu0 %1841
        %v1843 = vsel %vm1785, %v1825, 0.0
        %1844 = vadd.xlane.f32.xlu0 %v1843
        %v1845 = vpop.xlane.xlu0 %1844
        %v1846 = vsel %vm1785, %v1827, 0.0
        %1847 = vadd.xlane.f32.xlu0 %v1846
        %v1848 = vpop.xlane.xlu0 %1847
        %v1849 = vsel %vm1785, %v1829, 0.0
        %1850 = vadd.xlane.f32.xlu0 %v1849
        %v1851 = vpop.xlane.xlu0 %1850
        %v1852 = vsel %vm1785, %v1831, 0.0
        %1853 = vadd.xlane.f32.xlu0 %v1852
        %v1854 = vpop.xlane.xlu0 %1853
        %v1855 = vsel %vm1785, %v1833, 0.0
        %1856 = vadd.xlane.f32.xlu0 %v1855
        %v1857 = vpop.xlane.xlu0 %1856
        %v1858 = vrcp.pop %v1836
        %v1859 = vrcp.pop %v1839
        %v1860 = vrcp.pop %v1842
        %v1861 = vrcp.pop %v1845
        %v1862 = vrcp.pop %v1848
        %v1863 = vrcp.pop %v1851
        %v1864 = vrcp.pop %v1854
        %v1865 = vrcp.pop %v1857
        %v1866 = vmul.f32 %v1819, %v1858
        %v1867 = vmul.f32 %v1821, %v1859
        %v1868 = vmul.f32 %v1823, %v1860
        %v1869 = vmul.f32 %v1825, %v1861
        %v1870 = vmul.f32 %v1827, %v1862
        %v1871 = vmul.f32 %v1829, %v1863
        %v1872 = vmul.f32 %v1831, %v1864
        %v1873 = vmul.f32 %v1833, %v1865
        %v1874 = vpack.c.bf16 %v1867, %v1866
        %v1875 = vpack.c.bf16 %v1869, %v1868
        %v1876 = vpack.c.bf16 %v1871, %v1870
        %v1877 = vpack.c.bf16 %v1873, %v1872
        %v1879 = vsel %vm1785, %v1874, 0
        %1881 = vmatprep.subr.bf16.mxu0 0
        %1882 = vmatpush1.bf16.msra.mxu0 %v1582
        %1883 = vmatprep.subr.bf16.mxu0 0
        %1884 = vmatpush1.bf16.msra.mxu0 0
        %1885 = vmatprep.subr.bf16.mxu0 0
        %1886 = vmatpush1.bf16.msra.mxu0 0
        %1887 = vmatprep.subr.bf16.mxu0 0
        %1888 = vmatpush1.bf16.msra.mxu0 0
        %1889 = vmatprep.subr.bf16.mxu0 0
        %1890 = vmatpush1.bf16.msra.mxu0 0
        %1891 = vmatprep.subr.bf16.mxu0 0
        %1892 = vmatpush1.bf16.msra.mxu0 0
        %1893 = vmatprep.subr.bf16.mxu0 0
        %1894 = vmatpush1.bf16.msra.mxu0 0
        %1895 = vmatprep.subr.bf16.mxu0 0
        %1896 = vmatpush1.bf16.msra.mxu0 0
        %1897 = vmatprep.subr.bf16.mxu0 0
        %1898 = vmatpush1.bf16.msra.mxu0 0
        %1899 = vmatprep.subr.bf16.mxu0 0
        %1900 = vmatpush1.bf16.msra.mxu0 0
        %1901 = vmatprep.subr.bf16.mxu0 0
        %1902 = vmatpush1.bf16.msra.mxu0 0
        %1903 = vmatprep.subr.bf16.mxu0 0
        %1904 = vmatpush1.bf16.msra.mxu0 0
        %1905 = vmatprep.subr.bf16.mxu0 0
        %1906 = vmatpush1.bf16.msra.mxu0 0
        %1907 = vmatprep.subr.bf16.mxu0 0
        %1908 = vmatpush1.bf16.msra.mxu0 0
        %1909 = vmatprep.subr.bf16.mxu0 0
        %1910 = vmatpush1.bf16.msra.mxu0 0
        %1911 = vmatprep.subr.bf16.mxu0 0
        %1912 = vmatpush1.bf16.msra.mxu0 0
        %1913 = vmatprep.mubr.bf16.mxu0 0
        %1914 = vmatmul.mubr.bf16.gmra.mrb[0].mxu0 %v1879
        %v1915 = vpop.f32.mrb[0].mxu0
        %v1916 = vadd.f32 0.0, %v1915
        %v1917 = vpop.f32.mrb[0].mxu0
        %v1918 = vpop.f32.mrb[0].mxu0
        %v1919 = vadd.f32 0.0, %v1918
        %v1920 = vpop.f32.mrb[0].mxu0
        %1921 = vdwg.mxu0
        %v1923 = vsel %vm1785, %v1875, 0
        %1925 = vmatprep.subr.bf16.mxu0 0
        %1926 = vmatpush1.bf16.msra.mxu0 %v1586
        %1927 = vmatprep.subr.bf16.mxu0 0
        %1928 = vmatpush1.bf16.msra.mxu0 0
        %1929 = vmatprep.subr.bf16.mxu0 0
        %1930 = vmatpush1.bf16.msra.mxu0 0
        %1931 = vmatprep.subr.bf16.mxu0 0
        %1932 = vmatpush1.bf16.msra.mxu0 0
        %1933 = vmatprep.subr.bf16.mxu0 0
        %1934 = vmatpush1.bf16.msra.mxu0 0
        %1935 = vmatprep.subr.bf16.mxu0 0
        %1936 = vmatpush1.bf16.msra.mxu0 0
        %1937 = vmatprep.subr.bf16.mxu0 0
        %1938 = vmatpush1.bf16.msra.mxu0 0
        %1939 = vmatprep.subr.bf16.mxu0 0
        %1940 = vmatpush1.bf16.msra.mxu0 0
        %1941 = vmatprep.subr.bf16.mxu0 0
        %1942 = vmatpush1.bf16.msra.mxu0 0
        %1943 = vmatprep.subr.bf16.mxu0 0
        %1944 = vmatpush1.bf16.msra.mxu0 0
        %1945 = vmatprep.subr.bf16.mxu0 0
        %1946 = vmatpush1.bf16.msra.mxu0 0
        %1947 = vmatprep.subr.bf16.mxu0 0
        %1948 = vmatpush1.bf16.msra.mxu0 0
        %1949 = vmatprep.subr.bf16.mxu0 0
        %1950 = vmatpush1.bf16.msra.mxu0 0
        %1951 = vmatprep.subr.bf16.mxu0 0
        %1952 = vmatpush1.bf16.msra.mxu0 0
        %1953 = vmatprep.subr.bf16.mxu0 0
        %1954 = vmatpush1.bf16.msra.mxu0 0
        %1955 = vmatprep.subr.bf16.mxu0 0
        %1956 = vmatpush1.bf16.msra.mxu0 0
        %1957 = vmatprep.mubr.bf16.mxu0 0
        %1958 = vmatmul.mubr.bf16.gmra.mrb[0].mxu0 %v1923
        %v1959 = vpop.f32.mrb[0].mxu0
        %v1960 = vadd.f32 0.0, %v1959
        %v1961 = vpop.f32.mrb[0].mxu0
        %v1962 = vpop.f32.mrb[0].mxu0
        %v1963 = vadd.f32 0.0, %v1962
        %v1964 = vpop.f32.mrb[0].mxu0
        %1965 = vdwg.mxu0
        %v1967 = vsel %vm1785, %v1876, 0
        %1969 = vmatprep.subr.bf16.mxu0 0
        %1970 = vmatpush1.bf16.msra.mxu0 %v1590
        %1971 = vmatprep.subr.bf16.mxu0 0
        %1972 = vmatpush1.bf16.msra.mxu0 0
        %1973 = vmatprep.subr.bf16.mxu0 0
        %1974 = vmatpush1.bf16.msra.mxu0 0
        %1975 = vmatprep.subr.bf16.mxu0 0
        %1976 = vmatpush1.bf16.msra.mxu0 0
        %1977 = vmatprep.subr.bf16.mxu0 0
        %1978 = vmatpush1.bf16.msra.mxu0 0
        %1979 = vmatprep.subr.bf16.mxu0 0
        %1980 = vmatpush1.bf16.msra.mxu0 0
        %1981 = vmatprep.subr.bf16.mxu0 0
        %1982 = vmatpush1.bf16.msra.mxu0 0
        %1983 = vmatprep.subr.bf16.mxu0 0
        %1984 = vmatpush1.bf16.msra.mxu0 0
        %1985 = vmatprep.subr.bf16.mxu0 0
        %1986 = vmatpush1.bf16.msra.mxu0 0
        %1987 = vmatprep.subr.bf16.mxu0 0
        %1988 = vmatpush1.bf16.msra.mxu0 0
        %1989 = vmatprep.subr.bf16.mxu0 0
        %1990 = vmatpush1.bf16.msra.mxu0 0
        %1991 = vmatprep.subr.bf16.mxu0 0
        %1992 = vmatpush1.bf16.msra.mxu0 0
        %1993 = vmatprep.subr.bf16.mxu0 0
        %1994 = vmatpush1.bf16.msra.mxu0 0
        %1995 = vmatprep.subr.bf16.mxu0 0
        %1996 = vmatpush1.bf16.msra.mxu0 0
        %1997 = vmatprep.subr.bf16.mxu0 0
        %1998 = vmatpush1.bf16.msra.mxu0 0
        %1999 = vmatprep.subr.bf16.mxu0 0
        %2000 = vmatpush1.bf16.msra.mxu0 0
        %2001 = vmatprep.mubr.bf16.mxu0 0
        %2002 = vmatmul.mubr.bf16.gmra.mrb[0].mxu0 %v1967
        %v2003 = vpop.f32.mrb[0].mxu0
        %v2004 = vadd.f32 0.0, %v2003
        %v2005 = vpop.f32.mrb[0].mxu0
        %v2006 = vpop.f32.mrb[0].mxu0
        %v2007 = vadd.f32 0.0, %v2006
        %v2008 = vpop.f32.mrb[0].mxu0
        %2009 = vdwg.mxu0
        %v2011 = vsel %vm1785, %v1877, 0
        %2013 = vmatprep.subr.bf16.mxu0 0
        %2014 = vmatpush1.bf16.msra.mxu0 %v1594
        %2015 = vmatprep.subr.bf16.mxu0 0
        %2016 = vmatpush1.bf16.msra.mxu0 0
        %2017 = vmatprep.subr.bf16.mxu0 0
        %2018 = vmatpush1.bf16.msra.mxu0 0
        %2019 = vmatprep.subr.bf16.mxu0 0
        %2020 = vmatpush1.bf16.msra.mxu0 0
        %2021 = vmatprep.subr.bf16.mxu0 0
        %2022 = vmatpush1.bf16.msra.mxu0 0
        %2023 = vmatprep.subr.bf16.mxu0 0
        %2024 = vmatpush1.bf16.msra.mxu0 0
        %2025 = vmatprep.subr.bf16.mxu0 0
        %2026 = vmatpush1.bf16.msra.mxu0 0
        %2027 = vmatprep.subr.bf16.mxu0 0
        %2028 = vmatpush1.bf16.msra.mxu0 0
        %2029 = vmatprep.subr.bf16.mxu0 0
        %2030 = vmatpush1.bf16.msra.mxu0 0
        %2031 = vmatprep.subr.bf16.mxu0 0
        %2032 = vmatpush1.bf16.msra.mxu0 0
        %2033 = vmatprep.subr.bf16.mxu0 0
        %2034 = vmatpush1.bf16.msra.mxu0 0
        %2035 = vmatprep.subr.bf16.mxu0 0
        %2036 = vmatpush1.bf16.msra.mxu0 0
        %2037 = vmatprep.subr.bf16.mxu0 0
        %2038 = vmatpush1.bf16.msra.mxu0 0
        %2039 = vmatprep.subr.bf16.mxu0 0
        %2040 = vmatpush1.bf16.msra.mxu0 0
        %2041 = vmatprep.subr.bf16.mxu0 0
        %2042 = vmatpush1.bf16.msra.mxu0 0
        %2043 = vmatprep.subr.bf16.mxu0 0
        %2044 = vmatpush1.bf16.msra.mxu0 0
        %2045 = vmatprep.mubr.bf16.mxu0 0
        %2046 = vmatmul.mubr.bf16.gmra.mrb[0].mxu0 %v2011
        %v2047 = vpop.f32.mrb[0].mxu0
        %v2048 = vadd.f32 0.0, %v2047
        %v2049 = vpop.f32.mrb[0].mxu0
        %v2050 = vpop.f32.mrb[0].mxu0
        %v2051 = vadd.f32 0.0, %v2050
        %v2052 = vpop.f32.mrb[0].mxu0
        %2053 = vdwg.mxu0
        %v2054 = vcombine.low %v1916, %v2004
        %v2055 = vcombine.high %v1916, %v2004
        %v2057 = vunpack.c.l.s4 1983009808
        %v2058 = vunpack.c.0.s8 %v2057
        %v2059 = vlaneseq
        %v2060 = vshrl.u32 %v2059, 7
        %v2061 = vsub.s32 %v2058, %v2060
        %v2062 = vrot.slane %v2054, %v2061
        %v2064 = vunpack.c.l.s4 1983009808
        %v2065 = vunpack.c.0.s8 %v2064
        %v2066 = vlaneseq
        %v2067 = vshrl.u32 %v2066, 7
        %v2068 = vsub.s32 %v2065, %v2067
        %v2069 = vrot.slane %v2055, %v2068
        %v2070 = vcombine.low %v1960, %v2048
        %v2071 = vcombine.high %v1960, %v2048
        %v2073 = vunpack.c.l.s4 1983009808
        %v2074 = vunpack.c.0.s8 %v2073
        %v2075 = vlaneseq
        %v2076 = vshrl.u32 %v2075, 7
        %v2077 = vsub.s32 %v2074, %v2076
        %v2078 = vrot.slane %v2070, %v2077
        %v2080 = vunpack.c.l.s4 1983009808
        %v2081 = vunpack.c.0.s8 %v2080
        %v2082 = vlaneseq
        %v2083 = vshrl.u32 %v2082, 7
        %v2084 = vsub.s32 %v2081, %v2083
        %v2085 = vrot.slane %v2071, %v2084
        %v2086 = vcombine.low %v2062, %v2078
        %v2087 = vcombine.high %v2062, %v2078
        %v2089 = vunpack.c.l.s4 1934713408
        %v2090 = vunpack.c.0.s8 %v2089
        %v2091 = vlaneseq
        %v2092 = vshrl.u32 %v2091, 7
        %v2093 = vsub.s32 %v2090, %v2092
        %v2094 = vrot.slane %v2086, %v2093
        %v2096 = vunpack.c.l.s4 1934713408
        %v2097 = vunpack.c.0.s8 %v2096
        %v2098 = vlaneseq
        %v2099 = vshrl.u32 %v2098, 7
        %v2100 = vsub.s32 %v2097, %v2099
        %v2101 = vrot.slane %v2087, %v2100
        %v2102 = vcombine.low %v2069, %v2085
        %v2103 = vcombine.high %v2069, %v2085
        %v2105 = vunpack.c.l.s4 1934713408
        %v2106 = vunpack.c.0.s8 %v2105
        %v2107 = vlaneseq
        %v2108 = vshrl.u32 %v2107, 7
        %v2109 = vsub.s32 %v2106, %v2108
        %v2110 = vrot.slane %v2102, %v2109
        %v2112 = vunpack.c.l.s4 1934713408
        %v2113 = vunpack.c.0.s8 %v2112
        %v2114 = vlaneseq
        %v2115 = vshrl.u32 %v2114, 7
        %v2116 = vsub.s32 %v2113, %v2115
        %v2117 = vrot.slane %v2103, %v2116
        %v2118 = vcombine.high %v2094, 0.0
        %v2119 = vcombine.high %v2101, 0.0
        %v2120 = vcombine.high %v2110, 0.0
        %v2121 = vcombine.high %v2117, 0.0
        %v2122 = vcombine.low %v1919, %v2007
        %v2123 = vcombine.high %v1919, %v2007
        %v2125 = vunpack.c.l.s4 1983009808
        %v2126 = vunpack.c.0.s8 %v2125
        %v2127 = vlaneseq
        %v2128 = vshrl.u32 %v2127, 7
        %v2129 = vsub.s32 %v2126, %v2128
        %v2130 = vrot.slane %v2122, %v2129
        %v2132 = vunpack.c.l.s4 1983009808
        %v2133 = vunpack.c.0.s8 %v2132
        %v2134 = vlaneseq
        %v2135 = vshrl.u32 %v2134, 7
        %v2136 = vsub.s32 %v2133, %v2135
        %v2137 = vrot.slane %v2123, %v2136
        %v2138 = vcombine.low %v1963, %v2051
        %v2139 = vcombine.high %v1963, %v2051
        %v2141 = vunpack.c.l.s4 1983009808
        %v2142 = vunpack.c.0.s8 %v2141
        %v2143 = vlaneseq
        %v2144 = vshrl.u32 %v2143, 7
        %v2145 = vsub.s32 %v2142, %v2144
        %v2146 = vrot.slane %v2138, %v2145
        %v2148 = vunpack.c.l.s4 1983009808
        %v2149 = vunpack.c.0.s8 %v2148
        %v2150 = vlaneseq
        %v2151 = vshrl.u32 %v2150, 7
        %v2152 = vsub.s32 %v2149, %v2151
        %v2153 = vrot.slane %v2139, %v2152
        %v2154 = vcombine.low %v2130, %v2146
        %v2155 = vcombine.high %v2130, %v2146
        %v2157 = vunpack.c.l.s4 1934713408
        %v2158 = vunpack.c.0.s8 %v2157
        %v2159 = vlaneseq
        %v2160 = vshrl.u32 %v2159, 7
        %v2161 = vsub.s32 %v2158, %v2160
        %v2162 = vrot.slane %v2154, %v2161
        %v2164 = vunpack.c.l.s4 1934713408
        %v2165 = vunpack.c.0.s8 %v2164
        %v2166 = vlaneseq
        %v2167 = vshrl.u32 %v2166, 7
        %v2168 = vsub.s32 %v2165, %v2167
        %v2169 = vrot.slane %v2155, %v2168
        %v2170 = vcombine.low %v2137, %v2153
        %v2171 = vcombine.high %v2137, %v2153
        %v2173 = vunpack.c.l.s4 1934713408
        %v2174 = vunpack.c.0.s8 %v2173
        %v2175 = vlaneseq
        %v2176 = vshrl.u32 %v2175, 7
        %v2177 = vsub.s32 %v2174, %v2176
        %v2178 = vrot.slane %v2170, %v2177
        %v2180 = vunpack.c.l.s4 1934713408
        %v2181 = vunpack.c.0.s8 %v2180
        %v2182 = vlaneseq
        %v2183 = vshrl.u32 %v2182, 7
        %v2184 = vsub.s32 %v2181, %v2183
        %v2185 = vrot.slane %v2171, %v2184
        %v2186 = vcombine.high %v2162, 0.0
        %v2187 = vcombine.high %v2169, 0.0
        %v2188 = vcombine.high %v2178, 0.0
        %v2189 = vcombine.high %v2185, 0.0
        %v2190 = vcombine.low %v2094, %v2101
        %v2192 = vunpack.c.l.s4 1983009808
        %v2193 = vunpack.c.0.s8 %v2192
        %v2194 = vlaneseq
        %v2195 = vshrl.u32 %v2194, 7
        %v2196 = vsub.s32 %v2193, %v2195
        %v2197 = vrot.slane %v2190, %v2196
        %v2198 = vcombine.low %v2118, %v2119
        %v2200 = vunpack.c.l.s4 1983009808
        %v2201 = vunpack.c.0.s8 %v2200
        %v2202 = vlaneseq
        %v2203 = vshrl.u32 %v2202, 7
        %v2204 = vsub.s32 %v2201, %v2203
        %v2205 = vrot.slane %v2198, %v2204
        %v2206 = vcombine.low %v2110, %v2117
        %v2208 = vunpack.c.l.s4 1983009808
        %v2209 = vunpack.c.0.s8 %v2208
        %v2210 = vlaneseq
        %v2211 = vshrl.u32 %v2210, 7
        %v2212 = vsub.s32 %v2209, %v2211
        %v2213 = vrot.slane %v2206, %v2212
        %v2214 = vcombine.low %v2120, %v2121
        %v2216 = vunpack.c.l.s4 1983009808
        %v2217 = vunpack.c.0.s8 %v2216
        %v2218 = vlaneseq
        %v2219 = vshrl.u32 %v2218, 7
        %v2220 = vsub.s32 %v2217, %v2219
        %v2221 = vrot.slane %v2214, %v2220
        %v2222 = vcombine.low %v2197, %v2205
        %v2223 = vcombine.high %v2197, %v2205
        %v2225 = vunpack.c.l.s4 1934713408
        %v2226 = vunpack.c.0.s8 %v2225
        %v2227 = vlaneseq
        %v2228 = vshrl.u32 %v2227, 7
        %v2229 = vsub.s32 %v2226, %v2228
        %v2230 = vrot.slane %v2222, %v2229
        %v2232 = vunpack.c.l.s4 1934713408
        %v2233 = vunpack.c.0.s8 %v2232
        %v2234 = vlaneseq
        %v2235 = vshrl.u32 %v2234, 7
        %v2236 = vsub.s32 %v2233, %v2235
        %v2237 = vrot.slane %v2223, %v2236
        %v2238 = vcombine.low %v2213, %v2221
        %v2239 = vcombine.high %v2213, %v2221
        %v2241 = vunpack.c.l.s4 1934713408
        %v2242 = vunpack.c.0.s8 %v2241
        %v2243 = vlaneseq
        %v2244 = vshrl.u32 %v2243, 7
        %v2245 = vsub.s32 %v2242, %v2244
        %v2246 = vrot.slane %v2238, %v2245
        %v2248 = vunpack.c.l.s4 1934713408
        %v2249 = vunpack.c.0.s8 %v2248
        %v2250 = vlaneseq
        %v2251 = vshrl.u32 %v2250, 7
        %v2252 = vsub.s32 %v2249, %v2251
        %v2253 = vrot.slane %v2239, %v2252
        %v2254 = vcombine.low %v2230, %v2246
        %v2255 = vcombine.high %v2230, %v2246
        %v2256 = vcombine.low %v2237, %v2253
        %v2257 = vcombine.high %v2237, %v2253
        %v2258 = vcombine.low %v2162, %v2169
        %v2260 = vunpack.c.l.s4 1983009808
        %v2261 = vunpack.c.0.s8 %v2260
        %v2262 = vlaneseq
        %v2263 = vshrl.u32 %v2262, 7
        %v2264 = vsub.s32 %v2261, %v2263
        %v2265 = vrot.slane %v2258, %v2264
        %v2266 = vcombine.low %v2186, %v2187
        %v2268 = vunpack.c.l.s4 1983009808
        %v2269 = vunpack.c.0.s8 %v2268
        %v2270 = vlaneseq
        %v2271 = vshrl.u32 %v2270, 7
        %v2272 = vsub.s32 %v2269, %v2271
        %v2273 = vrot.slane %v2266, %v2272
        %v2274 = vcombine.low %v2178, %v2185
        %v2276 = vunpack.c.l.s4 1983009808
        %v2277 = vunpack.c.0.s8 %v2276
        %v2278 = vlaneseq
        %v2279 = vshrl.u32 %v2278, 7
        %v2280 = vsub.s32 %v2277, %v2279
        %v2281 = vrot.slane %v2274, %v2280
        %v2282 = vcombine.low %v2188, %v2189
        %v2284 = vunpack.c.l.s4 1983009808
        %v2285 = vunpack.c.0.s8 %v2284
        %v2286 = vlaneseq
        %v2287 = vshrl.u32 %v2286, 7
        %v2288 = vsub.s32 %v2285, %v2287
        %v2289 = vrot.slane %v2282, %v2288
        %v2290 = vcombine.low %v2265, %v2273
        %v2291 = vcombine.high %v2265, %v2273
        %v2293 = vunpack.c.l.s4 1934713408
        %v2294 = vunpack.c.0.s8 %v2293
        %v2295 = vlaneseq
        %v2296 = vshrl.u32 %v2295, 7
        %v2297 = vsub.s32 %v2294, %v2296
        %v2298 = vrot.slane %v2290, %v2297
        %v2300 = vunpack.c.l.s4 1934713408
        %v2301 = vunpack.c.0.s8 %v2300
        %v2302 = vlaneseq
        %v2303 = vshrl.u32 %v2302, 7
        %v2304 = vsub.s32 %v2301, %v2303
        %v2305 = vrot.slane %v2291, %v2304
        %v2306 = vcombine.low %v2281, %v2289
        %v2307 = vcombine.high %v2281, %v2289
        %v2309 = vunpack.c.l.s4 1934713408
        %v2310 = vunpack.c.0.s8 %v2309
        %v2311 = vlaneseq
        %v2312 = vshrl.u32 %v2311, 7
        %v2313 = vsub.s32 %v2310, %v2312
        %v2314 = vrot.slane %v2306, %v2313
        %v2316 = vunpack.c.l.s4 1934713408
        %v2317 = vunpack.c.0.s8 %v2316
        %v2318 = vlaneseq
        %v2319 = vshrl.u32 %v2318, 7
        %v2320 = vsub.s32 %v2317, %v2319
        %v2321 = vrot.slane %v2307, %v2320
        %v2322 = vcombine.low %v2298, %v2314
        %v2323 = vcombine.high %v2298, %v2314
        %v2324 = vcombine.low %v2305, %v2321
        %v2325 = vcombine.high %v2305, %v2321
        %2328 = vrot.lane.b32.xlu0 %v2255, 32
        %v2329 = vpop.permute.xlu0 %2328
        %2330 = vrot.lane.b32.xlu0 %v2323, 32
        %v2331 = vpop.permute.xlu0 %2330
        %2336 = vrot.lane.b32.xlu0 %v2256, 64
        %v2337 = vpop.permute.xlu0 %2336
        %2338 = vrot.lane.b32.xlu0 %v2324, 64
        %v2339 = vpop.permute.xlu0 %2338
        %2344 = vrot.lane.b32.xlu0 %v2257, 96
        %v2345 = vpop.permute.xlu0 %2344
        %2346 = vrot.lane.b32.xlu0 %v2325, 96
        %v2347 = vpop.permute.xlu0 %2346
        %v2350 = vsel %vm1596, %v2254, %v2329
        %v2351 = vsel %vm1596, %v2322, %v2331
        %vm2352 = vcmask 523264
        %v2353 = vsel %vm2352, %v2350, %v2337
        %v2354 = vsel %vm2352, %v2351, %v2339
        %vm2355 = vcmask 785408
        %v2356 = vsel %vm2355, %v2353, %v2345
        %v2357 = vsel %vm2355, %v2354, %v2347
        %v2358 = vpack.c.bf16 %v2357, %v2356
        %v2359 = vld [vmem:[#allocation7] sm:$0xf]
        %v2360 = vld [vmem:[#allocation7 + $0x4] sm:$0xf]
        %v2361 = vld [vmem:[#allocation7 + $0x8] sm:$0xf]
        %v2362 = vld [vmem:[#allocation7 + $0xc] sm:$0xf]
        %v2363 = vld [vmem:[#allocation7 + $0x10] sm:$0xf]
        %v2364 = vld [vmem:[#allocation7 + $0x14] sm:$0xf]
        %v2365 = vld [vmem:[#allocation7 + $0x18] sm:$0xf]
        %v2366 = vld [vmem:[#allocation7 + $0x1c] sm:$0xf]
        %v2367 = vld [vmem:[#allocation7 + $0x20] sm:$0xf]
        %v2368 = vld [vmem:[#allocation7 + $0x24] sm:$0xf]
        %v2369 = vld [vmem:[#allocation7 + $0x28] sm:$0xf]
        %v2370 = vld [vmem:[#allocation7 + $0x2c] sm:$0xf]
        %v2371 = vld [vmem:[#allocation7 + $0x30] sm:$0xf]
        %v2372 = vld [vmem:[#allocation7 + $0x34] sm:$0xf]
        %v2373 = vld [vmem:[#allocation7 + $0x38] sm:$0xf]
        %v2374 = vld [vmem:[#allocation7 + $0x3c] sm:$0xf]
        %v2375 = vld [vmem:[%s4] sm:$0x1]
        %v2377 = vlaneseq
        %v2378 = vshrl.u32 %v2377, 7
        %v2379 = vsub.s32 0, %v2378
        %v2380 = vrot.slane %v2375, %v2379
        %v2398 = vunpack.c.l.b16 %v2359
        %v2399 = vunpack.c.l.b16 %v2360
        %v2400 = vunpack.c.l.b16 %v2361
        %v2401 = vunpack.c.l.b16 %v2362
        %v2402 = vunpack.c.l.b16 %v2363
        %v2403 = vunpack.c.l.b16 %v2364
        %v2404 = vunpack.c.l.b16 %v2365
        %v2405 = vunpack.c.l.b16 %v2366
        %v2406 = vunpack.c.l.b16 %v2367
        %v2407 = vunpack.c.l.b16 %v2368
        %v2408 = vunpack.c.l.b16 %v2369
        %v2409 = vunpack.c.l.b16 %v2370
        %v2410 = vunpack.c.l.b16 %v2371
        %v2411 = vunpack.c.l.b16 %v2372
        %v2412 = vunpack.c.l.b16 %v2373
        %v2413 = vunpack.c.l.b16 %v2374
        %v2414 = vpack.c.b16 %v2399, %v2398
        %v2415 = vpack.c.b16 %v2401, %v2400
        %v2416 = vpack.c.b16 %v2403, %v2402
        %v2417 = vpack.c.b16 %v2405, %v2404
        %v2418 = vpack.c.b16 %v2407, %v2406
        %v2419 = vpack.c.b16 %v2409, %v2408
        %v2420 = vpack.c.b16 %v2411, %v2410
        %v2421 = vpack.c.b16 %v2413, %v2412
        %2430 = vmatprep.subr.bf16.mxu0 0
        %2431 = vmatpush1.bf16.msra.mxu0 %v2414
        %2432 = vmatprep.subr.bf16.mxu0 0
        %2433 = vmatpush1.bf16.msra.mxu0 %v2415
        %2434 = vmatprep.subr.bf16.mxu0 0
        %2435 = vmatpush1.bf16.msra.mxu0 %v2416
        %2436 = vmatprep.subr.bf16.mxu0 0
        %2437 = vmatpush1.bf16.msra.mxu0 %v2417
        %2438 = vmatprep.subr.bf16.mxu0 0
        %2439 = vmatpush1.bf16.msra.mxu0 %v2418
        %2440 = vmatprep.subr.bf16.mxu0 0
        %2441 = vmatpush1.bf16.msra.mxu0 %v2419
        %2442 = vmatprep.subr.bf16.mxu0 0
        %2443 = vmatpush1.bf16.msra.mxu0 %v2420
        %2444 = vmatprep.subr.bf16.mxu0 0
        %2445 = vmatpush1.bf16.msra.mxu0 %v2421
        %2446 = vmatprep.subr.bf16.mxu0 0
        %2447 = vmatpush1.bf16.msra.mxu0 0
        %2448 = vmatprep.subr.bf16.mxu0 0
        %2449 = vmatpush1.bf16.msra.mxu0 0
        %2450 = vmatprep.subr.bf16.mxu0 0
        %2451 = vmatpush1.bf16.msra.mxu0 0
        %2452 = vmatprep.subr.bf16.mxu0 0
        %2453 = vmatpush1.bf16.msra.mxu0 0
        %2454 = vmatprep.subr.bf16.mxu0 0
        %2455 = vmatpush1.bf16.msra.mxu0 0
        %2456 = vmatprep.subr.bf16.mxu0 0
        %2457 = vmatpush1.bf16.msra.mxu0 0
        %2458 = vmatprep.subr.bf16.mxu0 0
        %2459 = vmatpush1.bf16.msra.mxu0 0
        %2460 = vmatprep.subr.bf16.mxu0 0
        %2461 = vmatpush1.bf16.msra.mxu0 0
        %2462 = vmatprep.mubr.bf16.mxu0 0
        %2463 = vmatmul.mubr.bf16.gmra.mrb[0].mxu0 %v2358
        %v2464 = vpop.f32.mrb[0].mxu0
        %v2465 = vadd.f32 %v2380, %v2464
        %v2466 = vpop.f32.mrb[0].mxu0
        %v2467 = vpop.f32.mrb[0].mxu0
        %v2468 = vadd.f32 %v2380, %v2467
        %v2469 = vpop.f32.mrb[0].mxu0
        %2470 = vdwg.mxu0
        %v2471 = vadd.f32 %v2465, %v518
        %v2472 = vadd.f32 %v2468, %v519
        %v2473 = vld [vmem:[%s5] sm:$0x1]
        %v2474 = vld [vmem:[%s6] sm:$0x1]
        %2475 = vadd.xlane.f32.xlu0 %v2471
        %v2476 = vpop.xlane.xlu0 %2475
        %2477 = vadd.xlane.f32.xlu0 %v2472
        %v2478 = vpop.xlane.xlu0 %2477
        %v2479 = vrcp.pop 128.0
        %v2480 = vmul.f32 %v2476, %v2479
        %v2481 = vmul.f32 %v2478, %v2479
        %v2482 = vsub.f32 %v2471, %v2480
        %v2483 = vsub.f32 %v2472, %v2481
        %v2484 = vmul.f32 %v2482, %v2482
        %v2485 = vmul.f32 %v2483, %v2483
        %2486 = vadd.xlane.f32.xlu0 %v2484
        %v2487 = vpop.xlane.xlu0 %2486
        %2488 = vadd.xlane.f32.xlu0 %v2485
        %v2489 = vpop.xlane.xlu0 %2488
        %v2490 = vmul.f32 %v2487, %v2479
        %v2491 = vmul.f32 %v2489, %v2479
        %v2492 = vadd.f32 %v2490, 1e-12
        %v2493 = vadd.f32 %v2491, 1e-12
        %v2494 = vrsqrt.pop %v2492
        %v2495 = vrsqrt.pop %v2493
        %v2496 = vmul.f32 %v2482, %v2494
        %v2497 = vmul.f32 %v2483, %v2495
        %v2499 = vlaneseq
        %v2500 = vshrl.u32 %v2499, 7
        %v2501 = vsub.s32 0, %v2500
        %v2502 = vrot.slane %v2473, %v2501
        %v2504 = vmul.f32 %v2502, %v2496
        %v2505 = vmul.f32 %v2502, %v2497
        %v2507 = vlaneseq
        %v2508 = vshrl.u32 %v2507, 7
        %v2509 = vsub.s32 0, %v2508
        %v2510 = vrot.slane %v2474, %v2509
        %v2512 = vadd.f32 %v2504, %v2510
        %v2513 = vadd.f32 %v2505, %v2510
        %v2514 = vpack.c.bf16 %v2513, %v2512
        %v2515 = vld [vmem:[#allocation8] sm:$0xff]
        %v2516 = vld [vmem:[#allocation8 + $0x8] sm:$0xff]
        %v2517 = vld [vmem:[#allocation8 + $0x10] sm:$0xff]
        %v2518 = vld [vmem:[#allocation8 + $0x18] sm:$0xff]
        %v2519 = vld [vmem:[#allocation8 + $0x20] sm:$0xff]
        %v2520 = vld [vmem:[#allocation8 + $0x28] sm:$0xff]
        %v2521 = vld [vmem:[#allocation8 + $0x30] sm:$0xff]
        %v2522 = vld [vmem:[#allocation8 + $0x38] sm:$0xff]
        %v2523 = vld [vmem:[#allocation8 + $0x40] sm:$0xff]
        %v2524 = vld [vmem:[#allocation8 + $0x48] sm:$0xff]
        %v2525 = vld [vmem:[#allocation8 + $0x50] sm:$0xff]
        %v2526 = vld [vmem:[#allocation8 + $0x58] sm:$0xff]
        %v2527 = vld [vmem:[#allocation8 + $0x60] sm:$0xff]
        %v2528 = vld [vmem:[#allocation8 + $0x68] sm:$0xff]
        %v2529 = vld [vmem:[#allocation8 + $0x70] sm:$0xff]
        %v2530 = vld [vmem:[#allocation8 + $0x78] sm:$0xff]
        %v2531 = vld [vmem:[%s8] sm:$0x3]
        %v2533 = vlaneseq
        %v2534 = vshrl.u32 %v2533, 7
        %v2535 = vsub.s32 0, %v2534
        %v2536 = vrot.slane %v2531, %v2535
        %v2537 = vlaneseq
        %v2538 = vshrl.u32 %v2537, 7
        %v2539 = vsub.s32 1, %v2538
        %v2540 = vrot.slane %v2531, %v2539
        %v2559 = vunpack.c.l.b16 %v2515
        %v2560 = vunpack.c.h.b16 %v2515
        %v2561 = vunpack.c.l.b16 %v2516
        %v2562 = vunpack.c.h.b16 %v2516
        %v2563 = vunpack.c.l.b16 %v2517
        %v2564 = vunpack.c.h.b16 %v2517
        %v2565 = vunpack.c.l.b16 %v2518
        %v2566 = vunpack.c.h.b16 %v2518
        %v2567 = vunpack.c.l.b16 %v2519
        %v2568 = vunpack.c.h.b16 %v2519
        %v2569 = vunpack.c.l.b16 %v2520
        %v2570 = vunpack.c.h.b16 %v2520
        %v2571 = vunpack.c.l.b16 %v2521
        %v2572 = vunpack.c.h.b16 %v2521
        %v2573 = vunpack.c.l.b16 %v2522
        %v2574 = vunpack.c.h.b16 %v2522
        %v2575 = vunpack.c.l.b16 %v2523
        %v2576 = vunpack.c.h.b16 %v2523
        %v2577 = vunpack.c.l.b16 %v2524
        %v2578 = vunpack.c.h.b16 %v2524
        %v2579 = vunpack.c.l.b16 %v2525
        %v2580 = vunpack.c.h.b16 %v2525
        %v2581 = vunpack.c.l.b16 %v2526
        %v2582 = vunpack.c.h.b16 %v2526
        %v2583 = vunpack.c.l.b16 %v2527
        %v2584 = vunpack.c.h.b16 %v2527
        %v2585 = vunpack.c.l.b16 %v2528
        %v2586 = vunpack.c.h.b16 %v2528
        %v2587 = vunpack.c.l.b16 %v2529
        %v2588 = vunpack.c.h.b16 %v2529
        %v2589 = vunpack.c.l.b16 %v2530
        %v2590 = vunpack.c.h.b16 %v2530
        %v2591 = vpack.c.b16 %v2561, %v2559
        %v2592 = vpack.c.b16 %v2562, %v2560
        %v2593 = vpack.c.b16 %v2565, %v2563
        %v2594 = vpack.c.b16 %v2566, %v2564
        %v2595 = vpack.c.b16 %v2569, %v2567
        %v2596 = vpack.c.b16 %v2570, %v2568
        %v2597 = vpack.c.b16 %v2573, %v2571
        %v2598 = vpack.c.b16 %v2574, %v2572
        %v2599 = vpack.c.b16 %v2577, %v2575
        %v2600 = vpack.c.b16 %v2578, %v2576
        %v2601 = vpack.c.b16 %v2581, %v2579
        %v2602 = vpack.c.b16 %v2582, %v2580
        %v2603 = vpack.c.b16 %v2585, %v2583
        %v2604 = vpack.c.b16 %v2586, %v2584
        %v2605 = vpack.c.b16 %v2589, %v2587
        %v2606 = vpack.c.b16 %v2590, %v2588
        %2623 = vmatprep.subr.bf16.mxu0 %v2592
        %2624 = vmatpush1.bf16.msra.mxu0 %v2591
        %2625 = vmatprep.subr.bf16.mxu0 %v2594
        %2626 = vmatpush1.bf16.msra.mxu0 %v2593
        %2627 = vmatprep.subr.bf16.mxu0 %v2596
        %2628 = vmatpush1.bf16.msra.mxu0 %v2595
        %2629 = vmatprep.subr.bf16.mxu0 %v2598
        %2630 = vmatpush1.bf16.msra.mxu0 %v2597
        %2631 = vmatprep.subr.bf16.mxu0 %v2600
        %2632 = vmatpush1.bf16.msra.mxu0 %v2599
        %2633 = vmatprep.subr.bf16.mxu0 %v2602
        %2634 = vmatpush1.bf16.msra.mxu0 %v2601
        %2635 = vmatprep.subr.bf16.mxu0 %v2604
        %2636 = vmatpush1.bf16.msra.mxu0 %v2603
        %2637 = vmatprep.subr.bf16.mxu0 %v2606
        %2638 = vmatpush1.bf16.msra.mxu0 %v2605
        %2639 = vmatprep.subr.bf16.mxu0 0
        %2640 = vmatpush1.bf16.msra.mxu0 0
        %2641 = vmatprep.subr.bf16.mxu0 0
        %2642 = vmatpush1.bf16.msra.mxu0 0
        %2643 = vmatprep.subr.bf16.mxu0 0
        %2644 = vmatpush1.bf16.msra.mxu0 0
        %2645 = vmatprep.subr.bf16.mxu0 0
        %2646 = vmatpush1.bf16.msra.mxu0 0
        %2647 = vmatprep.subr.bf16.mxu0 0
        %2648 = vmatpush1.bf16.msra.mxu0 0
        %2649 = vmatprep.subr.bf16.mxu0 0
        %2650 = vmatpush1.bf16.msra.mxu0 0
        %2651 = vmatprep.subr.bf16.mxu0 0
        %2652 = vmatpush1.bf16.msra.mxu0 0
        %2653 = vmatprep.subr.bf16.mxu0 0
        %2654 = vmatpush1.bf16.msra.mxu0 0
        %2655 = vmatprep.mubr.bf16.mxu0 0
        %2656 = vmatmul.mubr.bf16.gmra.mrb[0].mxu0 %v2514
        %v2657 = vpop.f32.mrb[0].mxu0
        %v2658 = vadd.f32 %v2536, %v2657
        %v2659 = vpop.f32.mrb[0].mxu0
        %v2660 = vadd.f32 %v2540, %v2659
        %v2661 = vpop.f32.mrb[0].mxu0
        %v2662 = vadd.f32 %v2536, %v2661
        %v2663 = vpop.f32.mrb[0].mxu0
        %v2664 = vadd.f32 %v2540, %v2663
        %2665 = vdwg.mxu0
        %v2666 = vmax.f32 %v2658, 0.0
        %v2667 = vmax.f32 %v2660, 0.0
        %v2668 = vmax.f32 %v2662, 0.0
        %v2669 = vmax.f32 %v2664, 0.0
        %v2670 = vpack.c.bf16 %v2668, %v2666
        %v2671 = vpack.c.bf16 %v2669, %v2667
        %v2672 = vld [vmem:[#allocation10] sm:$0xf]
        %v2673 = vld [vmem:[#allocation10 + $0x4] sm:$0xf]
        %v2674 = vld [vmem:[#allocation10 + $0x8] sm:$0xf]
        %v2675 = vld [vmem:[#allocation10 + $0xc] sm:$0xf]
        %v2676 = vld [vmem:[#allocation10 + $0x10] sm:$0xf]
        %v2677 = vld [vmem:[#allocation10 + $0x14] sm:$0xf]
        %v2678 = vld [vmem:[#allocation10 + $0x18] sm:$0xf]
        %v2679 = vld [vmem:[#allocation10 + $0x1c] sm:$0xf]
        %v2680 = vld [vmem:[#allocation10 + $0x20] sm:$0xf]
        %v2681 = vld [vmem:[#allocation10 + $0x24] sm:$0xf]
        %v2682 = vld [vmem:[#allocation10 + $0x28] sm:$0xf]
        %v2683 = vld [vmem:[#allocation10 + $0x2c] sm:$0xf]
        %v2684 = vld [vmem:[#allocation10 + $0x30] sm:$0xf]
        %v2685 = vld [vmem:[#allocation10 + $0x34] sm:$0xf]
        %v2686 = vld [vmem:[#allocation10 + $0x38] sm:$0xf]
        %v2687 = vld [vmem:[#allocation10 + $0x3c] sm:$0xf]
        %v2688 = vld [vmem:[#allocation10 + $0x40] sm:$0xf]
        %v2689 = vld [vmem:[#allocation10 + $0x44] sm:$0xf]
        %v2690 = vld [vmem:[#allocation10 + $0x48] sm:$0xf]
        %v2691 = vld [vmem:[#allocation10 + $0x4c] sm:$0xf]
        %v2692 = vld [vmem:[#allocation10 + $0x50] sm:$0xf]
        %v2693 = vld [vmem:[#allocation10 + $0x54] sm:$0xf]
        %v2694 = vld [vmem:[#allocation10 + $0x58] sm:$0xf]
        %v2695 = vld [vmem:[#allocation10 + $0x5c] sm:$0xf]
        %v2696 = vld [vmem:[#allocation10 + $0x60] sm:$0xf]
        %v2697 = vld [vmem:[#allocation10 + $0x64] sm:$0xf]
        %v2698 = vld [vmem:[#allocation10 + $0x68] sm:$0xf]
        %v2699 = vld [vmem:[#allocation10 + $0x6c] sm:$0xf]
        %v2700 = vld [vmem:[#allocation10 + $0x70] sm:$0xf]
        %v2701 = vld [vmem:[#allocation10 + $0x74] sm:$0xf]
        %v2702 = vld [vmem:[#allocation10 + $0x78] sm:$0xf]
        %v2703 = vld [vmem:[#allocation10 + $0x7c] sm:$0xf]
        %v2704 = vld [vmem:[%s10] sm:$0x1]
        %v2706 = vlaneseq
        %v2707 = vshrl.u32 %v2706, 7
        %v2708 = vsub.s32 0, %v2707
        %v2709 = vrot.slane %v2704, %v2708
        %v2743 = vunpack.c.l.b16 %v2672
        %v2744 = vunpack.c.l.b16 %v2673
        %v2745 = vunpack.c.l.b16 %v2674
        %v2746 = vunpack.c.l.b16 %v2675
        %v2747 = vunpack.c.l.b16 %v2676
        %v2748 = vunpack.c.l.b16 %v2677
        %v2749 = vunpack.c.l.b16 %v2678
        %v2750 = vunpack.c.l.b16 %v2679
        %v2751 = vunpack.c.l.b16 %v2680
        %v2752 = vunpack.c.l.b16 %v2681
        %v2753 = vunpack.c.l.b16 %v2682
        %v2754 = vunpack.c.l.b16 %v2683
        %v2755 = vunpack.c.l.b16 %v2684
        %v2756 = vunpack.c.l.b16 %v2685
        %v2757 = vunpack.c.l.b16 %v2686
        %v2758 = vunpack.c.l.b16 %v2687
        %v2759 = vunpack.c.l.b16 %v2688
        %v2760 = vunpack.c.l.b16 %v2689
        %v2761 = vunpack.c.l.b16 %v2690
        %v2762 = vunpack.c.l.b16 %v2691
        %v2763 = vunpack.c.l.b16 %v2692
        %v2764 = vunpack.c.l.b16 %v2693
        %v2765 = vunpack.c.l.b16 %v2694
        %v2766 = vunpack.c.l.b16 %v2695
        %v2767 = vunpack.c.l.b16 %v2696
        %v2768 = vunpack.c.l.b16 %v2697
        %v2769 = vunpack.c.l.b16 %v2698
        %v2770 = vunpack.c.l.b16 %v2699
        %v2771 = vunpack.c.l.b16 %v2700
        %v2772 = vunpack.c.l.b16 %v2701
        %v2773 = vunpack.c.l.b16 %v2702
        %v2774 = vunpack.c.l.b16 %v2703
        %v2775 = vpack.c.b16 %v2744, %v2743
        %v2776 = vpack.c.b16 %v2746, %v2745
        %v2777 = vpack.c.b16 %v2748, %v2747
        %v2778 = vpack.c.b16 %v2750, %v2749
        %v2779 = vpack.c.b16 %v2752, %v2751
        %v2780 = vpack.c.b16 %v2754, %v2753
        %v2781 = vpack.c.b16 %v2756, %v2755
        %v2782 = vpack.c.b16 %v2758, %v2757
        %v2783 = vpack.c.b16 %v2760, %v2759
        %v2784 = vpack.c.b16 %v2762, %v2761
        %v2785 = vpack.c.b16 %v2764, %v2763
        %v2786 = vpack.c.b16 %v2766, %v2765
        %v2787 = vpack.c.b16 %v2768, %v2767
        %v2788 = vpack.c.b16 %v2770, %v2769
        %v2789 = vpack.c.b16 %v2772, %v2771
        %v2790 = vpack.c.b16 %v2774, %v2773
        %2807 = vmatprep.subr.bf16.mxu0 0
        %2808 = vmatpush1.bf16.msra.mxu0 %v2775
        %2809 = vmatprep.subr.bf16.mxu0 0
        %2810 = vmatpush1.bf16.msra.mxu0 %v2776
        %2811 = vmatprep.subr.bf16.mxu0 0
        %2812 = vmatpush1.bf16.msra.mxu0 %v2777
        %2813 = vmatprep.subr.bf16.mxu0 0
        %2814 = vmatpush1.bf16.msra.mxu0 %v2778
        %2815 = vmatprep.subr.bf16.mxu0 0
        %2816 = vmatpush1.bf16.msra.mxu0 %v2779
        %2817 = vmatprep.subr.bf16.mxu0 0
        %2818 = vmatpush1.bf16.msra.mxu0 %v2780
        %2819 = vmatprep.subr.bf16.mxu0 0
        %2820 = vmatpush1.bf16.msra.mxu0 %v2781
        %2821 = vmatprep.subr.bf16.mxu0 0
        %2822 = vmatpush1.bf16.msra.mxu0 %v2782
        %2823 = vmatprep.subr.bf16.mxu0 0
        %2824 = vmatpush1.bf16.msra.mxu0 %v2783
        %2825 = vmatprep.subr.bf16.mxu0 0
        %2826 = vmatpush1.bf16.msra.mxu0 %v2784
        %2827 = vmatprep.subr.bf16.mxu0 0
        %2828 = vmatpush1.bf16.msra.mxu0 %v2785
        %2829 = vmatprep.subr.bf16.mxu0 0
        %2830 = vmatpush1.bf16.msra.mxu0 %v2786
        %2831 = vmatprep.subr.bf16.mxu0 0
        %2832 = vmatpush1.bf16.msra.mxu0 %v2787
        %2833 = vmatprep.subr.bf16.mxu0 0
        %2834 = vmatpush1.bf16.msra.mxu0 %v2788
        %2835 = vmatprep.subr.bf16.mxu0 0
        %2836 = vmatpush1.bf16.msra.mxu0 %v2789
        %2837 = vmatprep.subr.bf16.mxu0 0
        %2838 = vmatpush1.bf16.msra.mxu0 %v2790
        %2839 = vmatprep.mubr.bf16.mxu0 %v2671
        %2840 = vmatmul.mubr.bf16.gmra.mrb[0].mxu0 %v2670
        %v2841 = vpop.f32.mrb[0].mxu0
        %v2842 = vadd.f32 %v2709, %v2841
        %v2843 = vpop.f32.mrb[0].mxu0
        %v2844 = vpop.f32.mrb[0].mxu0
        %v2845 = vadd.f32 %v2709, %v2844
        %v2846 = vpop.f32.mrb[0].mxu0
        %2847 = vdwg.mxu0
        %v2848 = vadd.f32 %v2842, %v2512
        %v2849 = vadd.f32 %v2845, %v2513
        %v2850 = vld [vmem:[%s11] sm:$0x1]
        %v2851 = vld [vmem:[%s12] sm:$0x1]
        %2852 = vadd.xlane.f32.xlu0 %v2848
        %v2853 = vpop.xlane.xlu0 %2852
        %2854 = vadd.xlane.f32.xlu0 %v2849
        %v2855 = vpop.xlane.xlu0 %2854
        %v2856 = vmul.f32 %v2853, %v2479
        %v2857 = vmul.f32 %v2855, %v2479
        %v2858 = vsub.f32 %v2848, %v2856
        %v2859 = vsub.f32 %v2849, %v2857
        %v2860 = vmul.f32 %v2858, %v2858
        %v2861 = vmul.f32 %v2859, %v2859
        %2862 = vadd.xlane.f32.xlu0 %v2860
        %v2863 = vpop.xlane.xlu0 %2862
        %2864 = vadd.xlane.f32.xlu0 %v2861
        %v2865 = vpop.xlane.xlu0 %2864
        %v2866 = vmul.f32 %v2863, %v2479
        %v2867 = vmul.f32 %v2865, %v2479
        %v2868 = vadd.f32 %v2866, 1e-12
        %v2869 = vadd.f32 %v2867, 1e-12
        %v2870 = vrsqrt.pop %v2868
        %v2871 = vrsqrt.pop %v2869
        %v2872 = vmul.f32 %v2858, %v2870
        %v2873 = vmul.f32 %v2859, %v2871
        %v2875 = vlaneseq
        %v2876 = vshrl.u32 %v2875, 7
        %v2877 = vsub.s32 0, %v2876
        %v2878 = vrot.slane %v2850, %v2877
        %v2880 = vmul.f32 %v2878, %v2872
        %v2881 = vmul.f32 %v2878, %v2873
        %v2883 = vlaneseq
        %v2884 = vshrl.u32 %v2883, 7
        %v2885 = vsub.s32 0, %v2884
        %v2886 = vrot.slane %v2851, %v2885
        %v2888 = vadd.f32 %v2880, %v2886
        %v2889 = vadd.f32 %v2881, %v2886
        %2890 = vst [vmem:[%s516] sm:$0xff] %v2888
        %2891 = vst [vmem:[%s516 + $0x8] sm:$0xff] %v2889
        %s2892 = sand.u32 %s318, 1
        %s2893 = scalar_lea.sflag [#allocation4], %s2892
        %s2894 = sand.u32 %s318, 1
        %s2895 = smul.addr %s2894, 16
        %s2896 = scalar_lea.vmem [#allocation11], %s2895
        // Predicated region
        $region93: #{tpu_custom_call.1} parent=71 // pred_check
          %p2897 = pneg %p328
        $region94: #{tpu_custom_call.1} parent=71 // pred_check_branch
          %2899 = sbr.rel (%p2897) target = $region96
        $region95: #{tpu_custom_call.1} parent=71 // pred_region
          %s2901 = ssub.s32 256, 256
          %2902 = vsyncadd %s2893, %s2901
          %s2903 = smul.addr %s32, 2
          %s2904 = smul.addr %s2903, 128
          %s2905 = scalar_lea.hbm %s13, %s2904
          %s2906 = sshll.u32 %s2896, 4
          %s2907 = int_to_ptr.vmem [resolvable:$true] %s2906
          %2912 = dma.vmem_to_hbm [thread:$0]  %s2907, 256, %s2905, %s2893, 128, 128, 8
        $region96: #{tpu_custom_call.1} parent=71 // pred_fallthru
          _
      $region72: #{tpu_custom_call.1} parent=5 // pred_fallthru
        _
      %p2913 = scmp.le.s32.totalorder 2, %s27
      // Predicated region
      $region97: #{tpu_custom_call.1} parent=5 // pred_check
        %p2914 = pneg %p2913
      $region98: #{tpu_custom_call.1} parent=5 // pred_check_branch
        %2916 = sbr.rel (%p2914) target = $region100
      $region99: #{tpu_custom_call.1} parent=5 // pred_region
        %s2917 = ssub.s32 %s27, 2
        // Predicated region
        $region101: #{tpu_custom_call.1} parent=99 // pred_check
          %p2918 = pneg %p334
        $region102: #{tpu_custom_call.1} parent=99 // pred_check_branch
          %2920 = sbr.rel (%p2918) target = $region104
        $region103: #{tpu_custom_call.1} parent=99 // pred_region
          %s2921 = sand.u32 %s319, 1
          %s2922 = scalar_lea.sflag [#allocation4], %s2921
          %s2923 = sand.u32 %s319, 1
          %s2924 = smul.addr %s2923, 16
          %s2925 = scalar_lea.vmem [#allocation11], %s2924
          %2926 = dma.done %s2922, 256
        $region104: #{tpu_custom_call.1} parent=99 // pred_fallthru
          _
      $region100: #{tpu_custom_call.1} parent=5 // pred_fallthru
        _
    $region6: #{tpu_custom_call.1} parent=1 // loop_footer
      %s31 = sadd.s32 1, %s27
    $region7: #{tpu_custom_call.1} parent=1 // loop_footer_branch
      %26 = sbr.rel target = $region3
    $region8: #{tpu_custom_call.1} parent=1 // loop_exit
      _
    %2927 = vsyncpa [#allocation3], 1
    %s2928 = scalar_lea.sflag [#allocation3], 1
    %2929 = vsyncpa %s2928, 1
    %2930 = vsyncpa [#allocation6], 1
    %2931 = vsyncpa [#allocation9], 1
    %2932 = vsyncpa [#allocation4], 1
    %s2933 = scalar_lea.sflag [#allocation4], 1
    %2934 = vsyncpa %s2933, 1

</llo_original>
